<compile_context>
chip_gen: v6e
topology: v6e:2x2x1
jax: 0.10.0
libtpu: 0.0.40
codegen_flags: <defaults>
</compile_context>

<pallas_src>
import functools

import jax
import jax.numpy as jnp
from jax.experimental import pallas as pl
from jax.experimental.pallas import tpu as pltpu


# ----------------------------------------------------------------------------
# Fused Pallas kernel: L stacked LSTM layers + FC head, whole sequence in VMEM.
# ----------------------------------------------------------------------------
def _rnn_fused_kernel(*refs, T, Np, M, L):
    """refs = (x_flat, wih0_t, whh0_t, b0, [wcat_l, b_l]*(L-1), fc_w_t, fc_b, out).

    x_flat:  (T*Np, D)   time-major, batch-padded input, flattened over (T, Np)
    wih0_t:  (D, 4M)     layer-0 input->hidden weights (pre-transposed)
    whh0_t:  (M, 4M)     layer-0 hidden->hidden weights (pre-transposed)
    wcat_l:  (2M, 4M)    layer-l>0 fused [W_ih; W_hh] weights (pre-transposed)
    b_l:     (1, 4M)     b_ih + b_hh
    fc_w_t:  (M, K), fc_b: (1, K)
    out:     (Np, K)     FC output at the last time step
    """
    f32 = jnp.float32

    x_ref = refs[0]
    wih0_ref, whh0_ref, b0_ref = refs[1], refs[2], refs[3]
    wcat_refs = [None] + [refs[4 + 2 * (l - 1)] for l in range(1, L)]
    b_refs = [b0_ref] + [refs[5 + 2 * (l - 1)] for l in range(1, L)]
    base = 4 + 2 * (L - 1)
    fcw_ref, fcb_ref, out_ref = refs[base], refs[base + 1], refs[base + 2]

    # Hoisted layer-0 input projection: one big MXU matmul for all T steps
    # (bias folded in here once).
    g0_all = (
        jnp.dot(x_ref[...], wih0_ref[...], preferred_element_type=f32)
        + b0_ref[...]
    )                                                   # (T*Np, 4M)

    # Hoisted lane constants for the single-sigmoid gate activation:
    #   non-g lanes: sigmoid(x); g (cell-candidate) lanes: tanh(x)=2*sig(2x)-1.
    lane = jax.lax.broadcasted_iota(jnp.int32, (Np, 4 * M), 1)
    g_mask = (lane >= 2 * M) & (lane < 3 * M)
    g_scale = jnp.where(g_mask, 2.0, 1.0).astype(f32)   # 2 on g lanes, 1 else
    g_shift = jnp.where(g_mask, 1.0, 0.0).astype(f32)   # 1 on g lanes, 0 else

    def lstm_cell(gates, c):
        # ONE sigmoid pass over the full (Np, 4M) vreg; VPU pre-scale/fixup
        # turns the g lanes into tanh via 2*sigmoid(2x)-1.
        s = jax.nn.sigmoid(gates * g_scale)
        act = s * g_scale - g_shift
        i_g = act[:, 0 * M:1 * M]
        f_g = act[:, 1 * M:2 * M]
        g_g = act[:, 2 * M:3 * M]
        o_g = act[:, 3 * M:4 * M]
        c_new = f_g * c + i_g * g_g
        h_new = o_g * jnp.tanh(c_new)
        return h_new, c_new

    hs = [jnp.zeros((Np, M), f32) for _ in range(L)]
    cs = [jnp.zeros((Np, M), f32) for _ in range(L)]

    # Wavefront schedule: at wave w, layer l processes timestep t = w - l.
    # Every cell in a wave depends only on the previous wave's states, so the
    # serial chain is T+L-1 cells instead of T*L.  T, L are static and small,
    # so the whole thing is unrolled (full LLO scheduling visibility).
    for w in range(T + L - 1):
        new_hs = list(hs)
        new_cs = list(cs)
        for l in range(L):
            t = w - l
            if t < 0 or t >= T:
                continue
            if l == 0:
                gates = g0_all[t * Np:(t + 1) * Np, :] + jnp.dot(
                    hs[0], whh0_ref[...], preferred_element_type=f32)
            else:
                # Fused input/recurrent projection: one MXU push with
                # contraction depth 2M instead of two depth-M pushes.
                hcat = jnp.concatenate([hs[l - 1], hs[l]], axis=1)  # (Np, 2M)
                gates = (
                    jnp.dot(hcat, wcat_refs[l][...], preferred_element_type=f32)
                    + b_refs[l][...]
                )
            new_hs[l], new_cs[l] = lstm_cell(gates, cs[l])
        hs, cs = new_hs, new_cs

    # Fused FC head on the last-step top-layer hidden state.
    out_ref[...] = (
        jnp.dot(hs[L - 1], fcw_ref[...], preferred_element_type=f32)
        + fcb_ref[...]
    ).astype(out_ref.dtype)


# ----------------------------------------------------------------------------
# Wrapper
# ----------------------------------------------------------------------------
@functools.partial(jax.jit, static_argnames=("num_layers",))
def rnn_forward(x, params, num_layers):
    """Equivalent of RNN.forward (eval mode): x (N, T, D) batch-first -> (N, K)."""
    N, T, D = x.shape
    M = params["lstm"][0][1].shape[0]
    K = params["fc_w_t"].shape[1]

    # Pad batch to a multiple of 8 sublanes (min 8); padded rows discarded.
    Np = max(8, ((N + 7) // 8) * 8)
    x_tm = jnp.transpose(x, (1, 0, 2))                      # (T, N, D)
    x_tm = jnp.pad(x_tm, ((0, 0), (0, Np - N), (0, 0)))     # (T, Np, D)
    x_flat = x_tm.reshape(T * Np, D)

    wih0_t, whh0_t, b0 = params["lstm"][0]
    args = [x_flat, wih0_t, whh0_t, b0]
    for l in range(1, num_layers):
        wih_t, whh_t, b = params["lstm"][l]
        wcat = jnp.concatenate([wih_t, whh_t], axis=0)      # (2M, 4M)
        args += [wcat, b]
    args += [params["fc_w_t"], params["fc_b"]]

    vmem_spec = pl.BlockSpec(memory_space=pltpu.MemorySpace.VMEM)
    out_p = pl.pallas_call(
        functools.partial(_rnn_fused_kernel, T=T, Np=Np, M=M, L=num_layers),
        out_shape=jax.ShapeDtypeStruct((Np, K), jnp.float32),
        in_specs=[vmem_spec] * len(args),
        out_specs=vmem_spec,
        compiler_params=pltpu.CompilerParams(
            vmem_limit_bytes=64 * 1024 * 1024),
    )(*args)
    return out_p[:N]


# ----------------------------------------------------------------------------
# Deterministic parameter construction (PyTorch-style uniform init)
# ----------------------------------------------------------------------------
def make_params(key, D, M, L, K):
    bound = 1.0 / jnp.sqrt(jnp.float32(M))
    params = {"lstm": []}
    for l in range(L):
        d_in = D if l == 0 else M
        key, k1, k2, k3, k4 = jax.random.split(key, 5)
        w_ih = jax.random.uniform(k1, (4 * M, d_in), jnp.float32, -bound, bound)
        w_hh = jax.random.uniform(k2, (4 * M, M), jnp.float32, -bound, bound)
        b_ih = jax.random.uniform(k3, (4 * M,), jnp.float32, -bound, bound)
        b_hh = jax.random.uniform(k4, (4 * M,), jnp.float32, -bound, bound)
        params["lstm"].append(
            (w_ih.T, w_hh.T, (b_ih + b_hh).reshape(1, 4 * M)))
    key, k5, k6 = jax.random.split(key, 3)
    fc_w = jax.random.uniform(k5, (K, M), jnp.float32, -bound, bound)
    fc_b = jax.random.uniform(k6, (K,), jnp.float32, -bound, bound)
    params["fc_w_t"] = fc_w.T
    params["fc_b"] = fc_b.reshape(1, K)
    return params


# ----------------------------------------------------------------------------
# Pure-JAX reference (for numerical sanity check)
# ----------------------------------------------------------------------------
def rnn_forward_ref(x, params, num_layers):
    layer_in = jnp.transpose(x, (1, 0, 2))  # (T, N, D)
    N = x.shape[0]
    for l in range(num_layers):
        wih_t, whh_t, b = params["lstm"][l]
        M = whh_t.shape[0]

        def step(carry, x_t):
            h, c = carry
            gates = x_t @ wih_t + h @ whh_t + b
            i_g = jax.nn.sigmoid(gates[:, 0 * M:1 * M])
            f_g = jax.nn.sigmoid(gates[:, 1 * M:2 * M])
            g_g = jnp.tanh(gates[:, 2 * M:3 * M])
            o_g = jax.nn.sigmoid(gates[:, 3 * M:4 * M])
            c = f_g * c + i_g * g_g
            h = o_g * jnp.tanh(c)
            return (h, c), h

        h0 = jnp.zeros((N, M), jnp.float32)
        c0 = jnp.zeros((N, M), jnp.float32)
        _, layer_in = jax.lax.scan(step, (h0, c0), layer_in)
    last_h = layer_in[-1]
    return last_h @ params["fc_w_t"] + params["fc_b"]


# ----------------------------------------------------------------------------
if __name__ == "__main__":
    # Shapes implied by the module: X is (batch, seq, num_inputs).
    N, T = 2, 8               # batch, sequence length
    D, M, L, K = 8, 32, 2, 1  # num_inputs, num_hidden, num_rnnlayers, num_outputs

    key = jax.random.PRNGKey(0)
    key, kx = jax.random.split(key)
    x = jax.random.normal(kx, (N, T, D), jnp.float32)

    params = make_params(key, D, M, L, K)

    out = rnn_forward(x, params, L)
    out = jax.block_until_ready(out)

    ref = rnn_forward_ref(x, params, L)
    assert out.shape == (N, K), out.shape
    assert jnp.allclose(out, ref, atol=1e-4, rtol=1e-4), (out, ref)

    print("KERNEL_OK")
</pallas_src>

<mosaic_0001>
module attributes {stable_mosaic.version = 11 : i64} {
  func.func @_rnn_fused_kernel(%arg0: memref<64x8xf32, #tpu.memory_space<vmem>>, %arg1: memref<8x128xf32, #tpu.memory_space<vmem>>, %arg2: memref<32x128xf32, #tpu.memory_space<vmem>>, %arg3: memref<1x128xf32, #tpu.memory_space<vmem>>, %arg4: memref<64x128xf32, #tpu.memory_space<vmem>>, %arg5: memref<1x128xf32, #tpu.memory_space<vmem>>, %arg6: memref<32x1xf32, #tpu.memory_space<vmem>>, %arg7: memref<1x1xf32, #tpu.memory_space<vmem>>, %arg8: memref<8x1xf32, #tpu.memory_space<vmem>>) attributes {dimension_semantics = [], scalar_prefetch = 0 : i64, scratch_operands = 0 : i64, tpu.core_type = #tpu.core_type<tc>} {
    %c0 = arith.constant 0 : index
    %c0_0 = arith.constant 0 : index
    %0 = vector.load %arg0[%c0, %c0_0] : memref<64x8xf32, #tpu.memory_space<vmem>>, vector<64x8xf32>
    %c0_1 = arith.constant 0 : index
    %c0_2 = arith.constant 0 : index
    %1 = vector.load %arg1[%c0_1, %c0_2] : memref<8x128xf32, #tpu.memory_space<vmem>>, vector<8x128xf32>
    %cst = arith.constant dense<0.000000e+00> : vector<64x128xf32>
    %2 = tpu.matmul %0, %1, %cst {dimension_numbers = #tpu.dot_dimension_numbers<[1], [0], [0], [1], [0, 0, 1, 1], [], []>} : vector<64x8xf32>, vector<8x128xf32>, vector<64x128xf32> -> vector<64x128xf32>
    %c0_3 = arith.constant 0 : index
    %c0_4 = arith.constant 0 : index
    %3 = vector.load %arg3[%c0_3, %c0_4] : memref<1x128xf32, #tpu.memory_space<vmem>>, vector<1x128xf32>
    %4 = vector.broadcast %3 : vector<1x128xf32> to vector<64x128xf32>
    %5 = arith.addf %2, %4 : vector<64x128xf32>
    %6 = tpu.iota {dimensions = array<i32: 1>} : vector<8x128xi32>
    %c64_i32 = arith.constant 64 : i32
    %7 = vector.broadcast %c64_i32 : i32 to vector<8x128xi32>
    %8 = arith.cmpi sge, %6, %7 : vector<8x128xi32>
    %c96_i32 = arith.constant 96 : i32
    %9 = vector.broadcast %c96_i32 : i32 to vector<8x128xi32>
    %10 = arith.cmpi slt, %6, %9 : vector<8x128xi32>
    %11 = arith.andi %8, %10 : vector<8x128xi1>
    %cst_5 = arith.constant 2.000000e+00 : f32
    %cst_6 = arith.constant 1.000000e+00 : f32
    %12 = vector.broadcast %cst_5 : f32 to vector<8x128xf32>
    %13 = vector.broadcast %cst_6 : f32 to vector<8x128xf32>
    %14 = arith.select %11, %12, %13 : vector<8x128xi1>, vector<8x128xf32>
    %cst_7 = arith.constant 1.000000e+00 : f32
    %cst_8 = arith.constant 0.000000e+00 : f32
    %15 = vector.broadcast %cst_7 : f32 to vector<8x128xf32>
    %16 = vector.broadcast %cst_8 : f32 to vector<8x128xf32>
    %17 = arith.select %11, %15, %16 : vector<8x128xi1>, vector<8x128xf32>
    %cst_9 = arith.constant 0.000000e+00 : f32
    %18 = vector.broadcast %cst_9 : f32 to vector<8x32xf32>
    %cst_10 = arith.constant 0.000000e+00 : f32
    %19 = vector.broadcast %cst_10 : f32 to vector<8x32xf32>
    %cst_11 = arith.constant 0.000000e+00 : f32
    %20 = vector.broadcast %cst_11 : f32 to vector<8x32xf32>
    %cst_12 = arith.constant 0.000000e+00 : f32
    %21 = vector.broadcast %cst_12 : f32 to vector<8x32xf32>
    %22 = vector.extract_strided_slice %5 {offsets = [0, 0], sizes = [8, 128], strides = [1, 1]} : vector<64x128xf32> to vector<8x128xf32>
    %c0_13 = arith.constant 0 : index
    %c0_14 = arith.constant 0 : index
    %23 = vector.load %arg2[%c0_13, %c0_14] : memref<32x128xf32, #tpu.memory_space<vmem>>, vector<32x128xf32>
    %cst_15 = arith.constant dense<0.000000e+00> : vector<8x128xf32>
    %24 = tpu.matmul %18, %23, %cst_15 {dimension_numbers = #tpu.dot_dimension_numbers<[1], [0], [0], [1], [0, 0, 1, 1], [], []>} : vector<8x32xf32>, vector<32x128xf32>, vector<8x128xf32> -> vector<8x128xf32>
    %25 = arith.addf %22, %24 : vector<8x128xf32>
    %26 = arith.mulf %25, %14 : vector<8x128xf32>
    %27 = arith.negf %26 : vector<8x128xf32>
    %28 = math.exp %27 : vector<8x128xf32>
    %cst_16 = arith.constant 1.000000e+00 : f32
    %29 = vector.broadcast %cst_16 : f32 to vector<8x128xf32>
    %30 = arith.addf %29, %28 : vector<8x128xf32>
    %31 = arith.divf %29, %30 : vector<8x128xf32>
    %32 = arith.mulf %31, %14 : vector<8x128xf32>
    %33 = arith.subf %32, %17 : vector<8x128xf32>
    %34 = vector.extract_strided_slice %33 {offsets = [0, 0], sizes = [8, 32], strides = [1, 1]} : vector<8x128xf32> to vector<8x32xf32>
    %35 = vector.extract_strided_slice %33 {offsets = [0, 32], sizes = [8, 32], strides = [1, 1]} : vector<8x128xf32> to vector<8x32xf32>
    %36 = vector.extract_strided_slice %33 {offsets = [0, 64], sizes = [8, 32], strides = [1, 1]} : vector<8x128xf32> to vector<8x32xf32>
    %37 = vector.extract_strided_slice %33 {offsets = [0, 96], sizes = [8, 32], strides = [1, 1]} : vector<8x128xf32> to vector<8x32xf32>
    %38 = arith.mulf %35, %20 : vector<8x32xf32>
    %39 = arith.mulf %34, %36 : vector<8x32xf32>
    %40 = arith.addf %38, %39 : vector<8x32xf32>
    %41 = math.tanh %40 : vector<8x32xf32>
    %42 = arith.mulf %37, %41 : vector<8x32xf32>
    %43 = vector.extract_strided_slice %5 {offsets = [8, 0], sizes = [8, 128], strides = [1, 1]} : vector<64x128xf32> to vector<8x128xf32>
    %c0_17 = arith.constant 0 : index
    %c0_18 = arith.constant 0 : index
    %44 = vector.load %arg2[%c0_17, %c0_18] : memref<32x128xf32, #tpu.memory_space<vmem>>, vector<32x128xf32>
    %cst_19 = arith.constant dense<0.000000e+00> : vector<8x128xf32>
    %45 = tpu.matmul %42, %44, %cst_19 {dimension_numbers = #tpu.dot_dimension_numbers<[1], [0], [0], [1], [0, 0, 1, 1], [], []>} : vector<8x32xf32>, vector<32x128xf32>, vector<8x128xf32> -> vector<8x128xf32>
    %46 = arith.addf %43, %45 : vector<8x128xf32>
    %47 = arith.mulf %46, %14 : vector<8x128xf32>
    %48 = arith.negf %47 : vector<8x128xf32>
    %49 = math.exp %48 : vector<8x128xf32>
    %cst_20 = arith.constant 1.000000e+00 : f32
    %50 = vector.broadcast %cst_20 : f32 to vector<8x128xf32>
    %51 = arith.addf %50, %49 : vector<8x128xf32>
    %52 = arith.divf %50, %51 : vector<8x128xf32>
    %53 = arith.mulf %52, %14 : vector<8x128xf32>
    %54 = arith.subf %53, %17 : vector<8x128xf32>
    %55 = vector.extract_strided_slice %54 {offsets = [0, 0], sizes = [8, 32], strides = [1, 1]} : vector<8x128xf32> to vector<8x32xf32>
    %56 = vector.extract_strided_slice %54 {offsets = [0, 32], sizes = [8, 32], strides = [1, 1]} : vector<8x128xf32> to vector<8x32xf32>
    %57 = vector.extract_strided_slice %54 {offsets = [0, 64], sizes = [8, 32], strides = [1, 1]} : vector<8x128xf32> to vector<8x32xf32>
    %58 = vector.extract_strided_slice %54 {offsets = [0, 96], sizes = [8, 32], strides = [1, 1]} : vector<8x128xf32> to vector<8x32xf32>
    %59 = arith.mulf %56, %40 : vector<8x32xf32>
    %60 = arith.mulf %55, %57 : vector<8x32xf32>
    %61 = arith.addf %59, %60 : vector<8x32xf32>
    %62 = math.tanh %61 : vector<8x32xf32>
    %63 = arith.mulf %58, %62 : vector<8x32xf32>
    %64 = tpu.concatenate %42, %19 in 1 : vector<8x32xf32>, vector<8x32xf32> -> vector<8x64xf32>
    %c0_21 = arith.constant 0 : index
    %c0_22 = arith.constant 0 : index
    %65 = vector.load %arg4[%c0_21, %c0_22] : memref<64x128xf32, #tpu.memory_space<vmem>>, vector<64x128xf32>
    %cst_23 = arith.constant dense<0.000000e+00> : vector<8x128xf32>
    %66 = tpu.matmul %64, %65, %cst_23 {dimension_numbers = #tpu.dot_dimension_numbers<[1], [0], [0], [1], [0, 0, 1, 1], [], []>} : vector<8x64xf32>, vector<64x128xf32>, vector<8x128xf32> -> vector<8x128xf32>
    %c0_24 = arith.constant 0 : index
    %c0_25 = arith.constant 0 : index
    %67 = vector.load %arg5[%c0_24, %c0_25] : memref<1x128xf32, #tpu.memory_space<vmem>>, vector<1x128xf32>
    %68 = vector.broadcast %67 : vector<1x128xf32> to vector<8x128xf32>
    %69 = arith.addf %66, %68 : vector<8x128xf32>
    %70 = arith.mulf %69, %14 : vector<8x128xf32>
    %71 = arith.negf %70 : vector<8x128xf32>
    %72 = math.exp %71 : vector<8x128xf32>
    %cst_26 = arith.constant 1.000000e+00 : f32
    %73 = vector.broadcast %cst_26 : f32 to vector<8x128xf32>
    %74 = arith.addf %73, %72 : vector<8x128xf32>
    %75 = arith.divf %73, %74 : vector<8x128xf32>
    %76 = arith.mulf %75, %14 : vector<8x128xf32>
    %77 = arith.subf %76, %17 : vector<8x128xf32>
    %78 = vector.extract_strided_slice %77 {offsets = [0, 0], sizes = [8, 32], strides = [1, 1]} : vector<8x128xf32> to vector<8x32xf32>
    %79 = vector.extract_strided_slice %77 {offsets = [0, 32], sizes = [8, 32], strides = [1, 1]} : vector<8x128xf32> to vector<8x32xf32>
    %80 = vector.extract_strided_slice %77 {offsets = [0, 64], sizes = [8, 32], strides = [1, 1]} : vector<8x128xf32> to vector<8x32xf32>
    %81 = vector.extract_strided_slice %77 {offsets = [0, 96], sizes = [8, 32], strides = [1, 1]} : vector<8x128xf32> to vector<8x32xf32>
    %82 = arith.mulf %79, %21 : vector<8x32xf32>
    %83 = arith.mulf %78, %80 : vector<8x32xf32>
    %84 = arith.addf %82, %83 : vector<8x32xf32>
    %85 = math.tanh %84 : vector<8x32xf32>
    %86 = arith.mulf %81, %85 : vector<8x32xf32>
    %87 = vector.extract_strided_slice %5 {offsets = [16, 0], sizes = [8, 128], strides = [1, 1]} : vector<64x128xf32> to vector<8x128xf32>
    %c0_27 = arith.constant 0 : index
    %c0_28 = arith.constant 0 : index
    %88 = vector.load %arg2[%c0_27, %c0_28] : memref<32x128xf32, #tpu.memory_space<vmem>>, vector<32x128xf32>
    %cst_29 = arith.constant dense<0.000000e+00> : vector<8x128xf32>
    %89 = tpu.matmul %63, %88, %cst_29 {dimension_numbers = #tpu.dot_dimension_numbers<[1], [0], [0], [1], [0, 0, 1, 1], [], []>} : vector<8x32xf32>, vector<32x128xf32>, vector<8x128xf32> -> vector<8x128xf32>
    %90 = arith.addf %87, %89 : vector<8x128xf32>
    %91 = arith.mulf %90, %14 : vector<8x128xf32>
    %92 = arith.negf %91 : vector<8x128xf32>
    %93 = math.exp %92 : vector<8x128xf32>
    %cst_30 = arith.constant 1.000000e+00 : f32
    %94 = vector.broadcast %cst_30 : f32 to vector<8x128xf32>
    %95 = arith.addf %94, %93 : vector<8x128xf32>
    %96 = arith.divf %94, %95 : vector<8x128xf32>
    %97 = arith.mulf %96, %14 : vector<8x128xf32>
    %98 = arith.subf %97, %17 : vector<8x128xf32>
    %99 = vector.extract_strided_slice %98 {offsets = [0, 0], sizes = [8, 32], strides = [1, 1]} : vector<8x128xf32> to vector<8x32xf32>
    %100 = vector.extract_strided_slice %98 {offsets = [0, 32], sizes = [8, 32], strides = [1, 1]} : vector<8x128xf32> to vector<8x32xf32>
    %101 = vector.extract_strided_slice %98 {offsets = [0, 64], sizes = [8, 32], strides = [1, 1]} : vector<8x128xf32> to vector<8x32xf32>
    %102 = vector.extract_strided_slice %98 {offsets = [0, 96], sizes = [8, 32], strides = [1, 1]} : vector<8x128xf32> to vector<8x32xf32>
    %103 = arith.mulf %100, %61 : vector<8x32xf32>
    %104 = arith.mulf %99, %101 : vector<8x32xf32>
    %105 = arith.addf %103, %104 : vector<8x32xf32>
    %106 = math.tanh %105 : vector<8x32xf32>
    %107 = arith.mulf %102, %106 : vector<8x32xf32>
    %108 = tpu.concatenate %63, %86 in 1 : vector<8x32xf32>, vector<8x32xf32> -> vector<8x64xf32>
    %c0_31 = arith.constant 0 : index
    %c0_32 = arith.constant 0 : index
    %109 = vector.load %arg4[%c0_31, %c0_32] : memref<64x128xf32, #tpu.memory_space<vmem>>, vector<64x128xf32>
    %cst_33 = arith.constant dense<0.000000e+00> : vector<8x128xf32>
    %110 = tpu.matmul %108, %109, %cst_33 {dimension_numbers = #tpu.dot_dimension_numbers<[1], [0], [0], [1], [0, 0, 1, 1], [], []>} : vector<8x64xf32>, vector<64x128xf32>, vector<8x128xf32> -> vector<8x128xf32>
    %c0_34 = arith.constant 0 : index
    %c0_35 = arith.constant 0 : index
    %111 = vector.load %arg5[%c0_34, %c0_35] : memref<1x128xf32, #tpu.memory_space<vmem>>, vector<1x128xf32>
    %112 = vector.broadcast %111 : vector<1x128xf32> to vector<8x128xf32>
    %113 = arith.addf %110, %112 : vector<8x128xf32>
    %114 = arith.mulf %113, %14 : vector<8x128xf32>
    %115 = arith.negf %114 : vector<8x128xf32>
    %116 = math.exp %115 : vector<8x128xf32>
    %cst_36 = arith.constant 1.000000e+00 : f32
    %117 = vector.broadcast %cst_36 : f32 to vector<8x128xf32>
    %118 = arith.addf %117, %116 : vector<8x128xf32>
    %119 = arith.divf %117, %118 : vector<8x128xf32>
    %120 = arith.mulf %119, %14 : vector<8x128xf32>
    %121 = arith.subf %120, %17 : vector<8x128xf32>
    %122 = vector.extract_strided_slice %121 {offsets = [0, 0], sizes = [8, 32], strides = [1, 1]} : vector<8x128xf32> to vector<8x32xf32>
    %123 = vector.extract_strided_slice %121 {offsets = [0, 32], sizes = [8, 32], strides = [1, 1]} : vector<8x128xf32> to vector<8x32xf32>
    %124 = vector.extract_strided_slice %121 {offsets = [0, 64], sizes = [8, 32], strides = [1, 1]} : vector<8x128xf32> to vector<8x32xf32>
    %125 = vector.extract_strided_slice %121 {offsets = [0, 96], sizes = [8, 32], strides = [1, 1]} : vector<8x128xf32> to vector<8x32xf32>
    %126 = arith.mulf %123, %84 : vector<8x32xf32>
    %127 = arith.mulf %122, %124 : vector<8x32xf32>
    %128 = arith.addf %126, %127 : vector<8x32xf32>
    %129 = math.tanh %128 : vector<8x32xf32>
    %130 = arith.mulf %125, %129 : vector<8x32xf32>
    %131 = vector.extract_strided_slice %5 {offsets = [24, 0], sizes = [8, 128], strides = [1, 1]} : vector<64x128xf32> to vector<8x128xf32>
    %c0_37 = arith.constant 0 : index
    %c0_38 = arith.constant 0 : index
    %132 = vector.load %arg2[%c0_37, %c0_38] : memref<32x128xf32, #tpu.memory_space<vmem>>, vector<32x128xf32>
    %cst_39 = arith.constant dense<0.000000e+00> : vector<8x128xf32>
    %133 = tpu.matmul %107, %132, %cst_39 {dimension_numbers = #tpu.dot_dimension_numbers<[1], [0], [0], [1], [0, 0, 1, 1], [], []>} : vector<8x32xf32>, vector<32x128xf32>, vector<8x128xf32> -> vector<8x128xf32>
    %134 = arith.addf %131, %133 : vector<8x128xf32>
    %135 = arith.mulf %134, %14 : vector<8x128xf32>
    %136 = arith.negf %135 : vector<8x128xf32>
    %137 = math.exp %136 : vector<8x128xf32>
    %cst_40 = arith.constant 1.000000e+00 : f32
    %138 = vector.broadcast %cst_40 : f32 to vector<8x128xf32>
    %139 = arith.addf %138, %137 : vector<8x128xf32>
    %140 = arith.divf %138, %139 : vector<8x128xf32>
    %141 = arith.mulf %140, %14 : vector<8x128xf32>
    %142 = arith.subf %141, %17 : vector<8x128xf32>
    %143 = vector.extract_strided_slice %142 {offsets = [0, 0], sizes = [8, 32], strides = [1, 1]} : vector<8x128xf32> to vector<8x32xf32>
    %144 = vector.extract_strided_slice %142 {offsets = [0, 32], sizes = [8, 32], strides = [1, 1]} : vector<8x128xf32> to vector<8x32xf32>
    %145 = vector.extract_strided_slice %142 {offsets = [0, 64], sizes = [8, 32], strides = [1, 1]} : vector<8x128xf32> to vector<8x32xf32>
    %146 = vector.extract_strided_slice %142 {offsets = [0, 96], sizes = [8, 32], strides = [1, 1]} : vector<8x128xf32> to vector<8x32xf32>
    %147 = arith.mulf %144, %105 : vector<8x32xf32>
    %148 = arith.mulf %143, %145 : vector<8x32xf32>
    %149 = arith.addf %147, %148 : vector<8x32xf32>
    %150 = math.tanh %149 : vector<8x32xf32>
    %151 = arith.mulf %146, %150 : vector<8x32xf32>
    %152 = tpu.concatenate %107, %130 in 1 : vector<8x32xf32>, vector<8x32xf32> -> vector<8x64xf32>
    %c0_41 = arith.constant 0 : index
    %c0_42 = arith.constant 0 : index
    %153 = vector.load %arg4[%c0_41, %c0_42] : memref<64x128xf32, #tpu.memory_space<vmem>>, vector<64x128xf32>
    %cst_43 = arith.constant dense<0.000000e+00> : vector<8x128xf32>
    %154 = tpu.matmul %152, %153, %cst_43 {dimension_numbers = #tpu.dot_dimension_numbers<[1], [0], [0], [1], [0, 0, 1, 1], [], []>} : vector<8x64xf32>, vector<64x128xf32>, vector<8x128xf32> -> vector<8x128xf32>
    %c0_44 = arith.constant 0 : index
    %c0_45 = arith.constant 0 : index
    %155 = vector.load %arg5[%c0_44, %c0_45] : memref<1x128xf32, #tpu.memory_space<vmem>>, vector<1x128xf32>
    %156 = vector.broadcast %155 : vector<1x128xf32> to vector<8x128xf32>
    %157 = arith.addf %154, %156 : vector<8x128xf32>
    %158 = arith.mulf %157, %14 : vector<8x128xf32>
    %159 = arith.negf %158 : vector<8x128xf32>
    %160 = math.exp %159 : vector<8x128xf32>
    %cst_46 = arith.constant 1.000000e+00 : f32
    %161 = vector.broadcast %cst_46 : f32 to vector<8x128xf32>
    %162 = arith.addf %161, %160 : vector<8x128xf32>
    %163 = arith.divf %161, %162 : vector<8x128xf32>
    %164 = arith.mulf %163, %14 : vector<8x128xf32>
    %165 = arith.subf %164, %17 : vector<8x128xf32>
    %166 = vector.extract_strided_slice %165 {offsets = [0, 0], sizes = [8, 32], strides = [1, 1]} : vector<8x128xf32> to vector<8x32xf32>
    %167 = vector.extract_strided_slice %165 {offsets = [0, 32], sizes = [8, 32], strides = [1, 1]} : vector<8x128xf32> to vector<8x32xf32>
    %168 = vector.extract_strided_slice %165 {offsets = [0, 64], sizes = [8, 32], strides = [1, 1]} : vector<8x128xf32> to vector<8x32xf32>
    %169 = vector.extract_strided_slice %165 {offsets = [0, 96], sizes = [8, 32], strides = [1, 1]} : vector<8x128xf32> to vector<8x32xf32>
    %170 = arith.mulf %167, %128 : vector<8x32xf32>
    %171 = arith.mulf %166, %168 : vector<8x32xf32>
    %172 = arith.addf %170, %171 : vector<8x32xf32>
    %173 = math.tanh %172 : vector<8x32xf32>
    %174 = arith.mulf %169, %173 : vector<8x32xf32>
    %175 = vector.extract_strided_slice %5 {offsets = [32, 0], sizes = [8, 128], strides = [1, 1]} : vector<64x128xf32> to vector<8x128xf32>
    %c0_47 = arith.constant 0 : index
    %c0_48 = arith.constant 0 : index
    %176 = vector.load %arg2[%c0_47, %c0_48] : memref<32x128xf32, #tpu.memory_space<vmem>>, vector<32x128xf32>
    %cst_49 = arith.constant dense<0.000000e+00> : vector<8x128xf32>
    %177 = tpu.matmul %151, %176, %cst_49 {dimension_numbers = #tpu.dot_dimension_numbers<[1], [0], [0], [1], [0, 0, 1, 1], [], []>} : vector<8x32xf32>, vector<32x128xf32>, vector<8x128xf32> -> vector<8x128xf32>
    %178 = arith.addf %175, %177 : vector<8x128xf32>
    %179 = arith.mulf %178, %14 : vector<8x128xf32>
    %180 = arith.negf %179 : vector<8x128xf32>
    %181 = math.exp %180 : vector<8x128xf32>
    %cst_50 = arith.constant 1.000000e+00 : f32
    %182 = vector.broadcast %cst_50 : f32 to vector<8x128xf32>
    %183 = arith.addf %182, %181 : vector<8x128xf32>
    %184 = arith.divf %182, %183 : vector<8x128xf32>
    %185 = arith.mulf %184, %14 : vector<8x128xf32>
    %186 = arith.subf %185, %17 : vector<8x128xf32>
    %187 = vector.extract_strided_slice %186 {offsets = [0, 0], sizes = [8, 32], strides = [1, 1]} : vector<8x128xf32> to vector<8x32xf32>
    %188 = vector.extract_strided_slice %186 {offsets = [0, 32], sizes = [8, 32], strides = [1, 1]} : vector<8x128xf32> to vector<8x32xf32>
    %189 = vector.extract_strided_slice %186 {offsets = [0, 64], sizes = [8, 32], strides = [1, 1]} : vector<8x128xf32> to vector<8x32xf32>
    %190 = vector.extract_strided_slice %186 {offsets = [0, 96], sizes = [8, 32], strides = [1, 1]} : vector<8x128xf32> to vector<8x32xf32>
    %191 = arith.mulf %188, %149 : vector<8x32xf32>
    %192 = arith.mulf %187, %189 : vector<8x32xf32>
    %193 = arith.addf %191, %192 : vector<8x32xf32>
    %194 = math.tanh %193 : vector<8x32xf32>
    %195 = arith.mulf %190, %194 : vector<8x32xf32>
    %196 = tpu.concatenate %151, %174 in 1 : vector<8x32xf32>, vector<8x32xf32> -> vector<8x64xf32>
    %c0_51 = arith.constant 0 : index
    %c0_52 = arith.constant 0 : index
    %197 = vector.load %arg4[%c0_51, %c0_52] : memref<64x128xf32, #tpu.memory_space<vmem>>, vector<64x128xf32>
    %cst_53 = arith.constant dense<0.000000e+00> : vector<8x128xf32>
    %198 = tpu.matmul %196, %197, %cst_53 {dimension_numbers = #tpu.dot_dimension_numbers<[1], [0], [0], [1], [0, 0, 1, 1], [], []>} : vector<8x64xf32>, vector<64x128xf32>, vector<8x128xf32> -> vector<8x128xf32>
    %c0_54 = arith.constant 0 : index
    %c0_55 = arith.constant 0 : index
    %199 = vector.load %arg5[%c0_54, %c0_55] : memref<1x128xf32, #tpu.memory_space<vmem>>, vector<1x128xf32>
    %200 = vector.broadcast %199 : vector<1x128xf32> to vector<8x128xf32>
    %201 = arith.addf %198, %200 : vector<8x128xf32>
    %202 = arith.mulf %201, %14 : vector<8x128xf32>
    %203 = arith.negf %202 : vector<8x128xf32>
    %204 = math.exp %203 : vector<8x128xf32>
    %cst_56 = arith.constant 1.000000e+00 : f32
    %205 = vector.broadcast %cst_56 : f32 to vector<8x128xf32>
    %206 = arith.addf %205, %204 : vector<8x128xf32>
    %207 = arith.divf %205, %206 : vector<8x128xf32>
    %208 = arith.mulf %207, %14 : vector<8x128xf32>
    %209 = arith.subf %208, %17 : vector<8x128xf32>
    %210 = vector.extract_strided_slice %209 {offsets = [0, 0], sizes = [8, 32], strides = [1, 1]} : vector<8x128xf32> to vector<8x32xf32>
    %211 = vector.extract_strided_slice %209 {offsets = [0, 32], sizes = [8, 32], strides = [1, 1]} : vector<8x128xf32> to vector<8x32xf32>
    %212 = vector.extract_strided_slice %209 {offsets = [0, 64], sizes = [8, 32], strides = [1, 1]} : vector<8x128xf32> to vector<8x32xf32>
    %213 = vector.extract_strided_slice %209 {offsets = [0, 96], sizes = [8, 32], strides = [1, 1]} : vector<8x128xf32> to vector<8x32xf32>
    %214 = arith.mulf %211, %172 : vector<8x32xf32>
    %215 = arith.mulf %210, %212 : vector<8x32xf32>
    %216 = arith.addf %214, %215 : vector<8x32xf32>
    %217 = math.tanh %216 : vector<8x32xf32>
    %218 = arith.mulf %213, %217 : vector<8x32xf32>
    %219 = vector.extract_strided_slice %5 {offsets = [40, 0], sizes = [8, 128], strides = [1, 1]} : vector<64x128xf32> to vector<8x128xf32>
    %c0_57 = arith.constant 0 : index
    %c0_58 = arith.constant 0 : index
    %220 = vector.load %arg2[%c0_57, %c0_58] : memref<32x128xf32, #tpu.memory_space<vmem>>, vector<32x128xf32>
    %cst_59 = arith.constant dense<0.000000e+00> : vector<8x128xf32>
    %221 = tpu.matmul %195, %220, %cst_59 {dimension_numbers = #tpu.dot_dimension_numbers<[1], [0], [0], [1], [0, 0, 1, 1], [], []>} : vector<8x32xf32>, vector<32x128xf32>, vector<8x128xf32> -> vector<8x128xf32>
    %222 = arith.addf %219, %221 : vector<8x128xf32>
    %223 = arith.mulf %222, %14 : vector<8x128xf32>
    %224 = arith.negf %223 : vector<8x128xf32>
    %225 = math.exp %224 : vector<8x128xf32>
    %cst_60 = arith.constant 1.000000e+00 : f32
    %226 = vector.broadcast %cst_60 : f32 to vector<8x128xf32>
    %227 = arith.addf %226, %225 : vector<8x128xf32>
    %228 = arith.divf %226, %227 : vector<8x128xf32>
    %229 = arith.mulf %228, %14 : vector<8x128xf32>
    %230 = arith.subf %229, %17 : vector<8x128xf32>
    %231 = vector.extract_strided_slice %230 {offsets = [0, 0], sizes = [8, 32], strides = [1, 1]} : vector<8x128xf32> to vector<8x32xf32>
    %232 = vector.extract_strided_slice %230 {offsets = [0, 32], sizes = [8, 32], strides = [1, 1]} : vector<8x128xf32> to vector<8x32xf32>
    %233 = vector.extract_strided_slice %230 {offsets = [0, 64], sizes = [8, 32], strides = [1, 1]} : vector<8x128xf32> to vector<8x32xf32>
    %234 = vector.extract_strided_slice %230 {offsets = [0, 96], sizes = [8, 32], strides = [1, 1]} : vector<8x128xf32> to vector<8x32xf32>
    %235 = arith.mulf %232, %193 : vector<8x32xf32>
    %236 = arith.mulf %231, %233 : vector<8x32xf32>
    %237 = arith.addf %235, %236 : vector<8x32xf32>
    %238 = math.tanh %237 : vector<8x32xf32>
    %239 = arith.mulf %234, %238 : vector<8x32xf32>
    %240 = tpu.concatenate %195, %218 in 1 : vector<8x32xf32>, vector<8x32xf32> -> vector<8x64xf32>
    %c0_61 = arith.constant 0 : index
    %c0_62 = arith.constant 0 : index
    %241 = vector.load %arg4[%c0_61, %c0_62] : memref<64x128xf32, #tpu.memory_space<vmem>>, vector<64x128xf32>
    %cst_63 = arith.constant dense<0.000000e+00> : vector<8x128xf32>
    %242 = tpu.matmul %240, %241, %cst_63 {dimension_numbers = #tpu.dot_dimension_numbers<[1], [0], [0], [1], [0, 0, 1, 1], [], []>} : vector<8x64xf32>, vector<64x128xf32>, vector<8x128xf32> -> vector<8x128xf32>
    %c0_64 = arith.constant 0 : index
    %c0_65 = arith.constant 0 : index
    %243 = vector.load %arg5[%c0_64, %c0_65] : memref<1x128xf32, #tpu.memory_space<vmem>>, vector<1x128xf32>
    %244 = vector.broadcast %243 : vector<1x128xf32> to vector<8x128xf32>
    %245 = arith.addf %242, %244 : vector<8x128xf32>
    %246 = arith.mulf %245, %14 : vector<8x128xf32>
    %247 = arith.negf %246 : vector<8x128xf32>
    %248 = math.exp %247 : vector<8x128xf32>
    %cst_66 = arith.constant 1.000000e+00 : f32
    %249 = vector.broadcast %cst_66 : f32 to vector<8x128xf32>
    %250 = arith.addf %249, %248 : vector<8x128xf32>
    %251 = arith.divf %249, %250 : vector<8x128xf32>
    %252 = arith.mulf %251, %14 : vector<8x128xf32>
    %253 = arith.subf %252, %17 : vector<8x128xf32>
    %254 = vector.extract_strided_slice %253 {offsets = [0, 0], sizes = [8, 32], strides = [1, 1]} : vector<8x128xf32> to vector<8x32xf32>
    %255 = vector.extract_strided_slice %253 {offsets = [0, 32], sizes = [8, 32], strides = [1, 1]} : vector<8x128xf32> to vector<8x32xf32>
    %256 = vector.extract_strided_slice %253 {offsets = [0, 64], sizes = [8, 32], strides = [1, 1]} : vector<8x128xf32> to vector<8x32xf32>
    %257 = vector.extract_strided_slice %253 {offsets = [0, 96], sizes = [8, 32], strides = [1, 1]} : vector<8x128xf32> to vector<8x32xf32>
    %258 = arith.mulf %255, %216 : vector<8x32xf32>
    %259 = arith.mulf %254, %256 : vector<8x32xf32>
    %260 = arith.addf %258, %259 : vector<8x32xf32>
    %261 = math.tanh %260 : vector<8x32xf32>
    %262 = arith.mulf %257, %261 : vector<8x32xf32>
    %263 = vector.extract_strided_slice %5 {offsets = [48, 0], sizes = [8, 128], strides = [1, 1]} : vector<64x128xf32> to vector<8x128xf32>
    %c0_67 = arith.constant 0 : index
    %c0_68 = arith.constant 0 : index
    %264 = vector.load %arg2[%c0_67, %c0_68] : memref<32x128xf32, #tpu.memory_space<vmem>>, vector<32x128xf32>
    %cst_69 = arith.constant dense<0.000000e+00> : vector<8x128xf32>
    %265 = tpu.matmul %239, %264, %cst_69 {dimension_numbers = #tpu.dot_dimension_numbers<[1], [0], [0], [1], [0, 0, 1, 1], [], []>} : vector<8x32xf32>, vector<32x128xf32>, vector<8x128xf32> -> vector<8x128xf32>
    %266 = arith.addf %263, %265 : vector<8x128xf32>
    %267 = arith.mulf %266, %14 : vector<8x128xf32>
    %268 = arith.negf %267 : vector<8x128xf32>
    %269 = math.exp %268 : vector<8x128xf32>
    %cst_70 = arith.constant 1.000000e+00 : f32
    %270 = vector.broadcast %cst_70 : f32 to vector<8x128xf32>
    %271 = arith.addf %270, %269 : vector<8x128xf32>
    %272 = arith.divf %270, %271 : vector<8x128xf32>
    %273 = arith.mulf %272, %14 : vector<8x128xf32>
    %274 = arith.subf %273, %17 : vector<8x128xf32>
    %275 = vector.extract_strided_slice %274 {offsets = [0, 0], sizes = [8, 32], strides = [1, 1]} : vector<8x128xf32> to vector<8x32xf32>
    %276 = vector.extract_strided_slice %274 {offsets = [0, 32], sizes = [8, 32], strides = [1, 1]} : vector<8x128xf32> to vector<8x32xf32>
    %277 = vector.extract_strided_slice %274 {offsets = [0, 64], sizes = [8, 32], strides = [1, 1]} : vector<8x128xf32> to vector<8x32xf32>
    %278 = vector.extract_strided_slice %274 {offsets = [0, 96], sizes = [8, 32], strides = [1, 1]} : vector<8x128xf32> to vector<8x32xf32>
    %279 = arith.mulf %276, %237 : vector<8x32xf32>
    %280 = arith.mulf %275, %277 : vector<8x32xf32>
    %281 = arith.addf %279, %280 : vector<8x32xf32>
    %282 = math.tanh %281 : vector<8x32xf32>
    %283 = arith.mulf %278, %282 : vector<8x32xf32>
    %284 = tpu.concatenate %239, %262 in 1 : vector<8x32xf32>, vector<8x32xf32> -> vector<8x64xf32>
    %c0_71 = arith.constant 0 : index
    %c0_72 = arith.constant 0 : index
    %285 = vector.load %arg4[%c0_71, %c0_72] : memref<64x128xf32, #tpu.memory_space<vmem>>, vector<64x128xf32>
    %cst_73 = arith.constant dense<0.000000e+00> : vector<8x128xf32>
    %286 = tpu.matmul %284, %285, %cst_73 {dimension_numbers = #tpu.dot_dimension_numbers<[1], [0], [0], [1], [0, 0, 1, 1], [], []>} : vector<8x64xf32>, vector<64x128xf32>, vector<8x128xf32> -> vector<8x128xf32>
    %c0_74 = arith.constant 0 : index
    %c0_75 = arith.constant 0 : index
    %287 = vector.load %arg5[%c0_74, %c0_75] : memref<1x128xf32, #tpu.memory_space<vmem>>, vector<1x128xf32>
    %288 = vector.broadcast %287 : vector<1x128xf32> to vector<8x128xf32>
    %289 = arith.addf %286, %288 : vector<8x128xf32>
    %290 = arith.mulf %289, %14 : vector<8x128xf32>
    %291 = arith.negf %290 : vector<8x128xf32>
    %292 = math.exp %291 : vector<8x128xf32>
    %cst_76 = arith.constant 1.000000e+00 : f32
    %293 = vector.broadcast %cst_76 : f32 to vector<8x128xf32>
    %294 = arith.addf %293, %292 : vector<8x128xf32>
    %295 = arith.divf %293, %294 : vector<8x128xf32>
    %296 = arith.mulf %295, %14 : vector<8x128xf32>
    %297 = arith.subf %296, %17 : vector<8x128xf32>
    %298 = vector.extract_strided_slice %297 {offsets = [0, 0], sizes = [8, 32], strides = [1, 1]} : vector<8x128xf32> to vector<8x32xf32>
    %299 = vector.extract_strided_slice %297 {offsets = [0, 32], sizes = [8, 32], strides = [1, 1]} : vector<8x128xf32> to vector<8x32xf32>
    %300 = vector.extract_strided_slice %297 {offsets = [0, 64], sizes = [8, 32], strides = [1, 1]} : vector<8x128xf32> to vector<8x32xf32>
    %301 = vector.extract_strided_slice %297 {offsets = [0, 96], sizes = [8, 32], strides = [1, 1]} : vector<8x128xf32> to vector<8x32xf32>
    %302 = arith.mulf %299, %260 : vector<8x32xf32>
    %303 = arith.mulf %298, %300 : vector<8x32xf32>
    %304 = arith.addf %302, %303 : vector<8x32xf32>
    %305 = math.tanh %304 : vector<8x32xf32>
    %306 = arith.mulf %301, %305 : vector<8x32xf32>
    %307 = vector.extract_strided_slice %5 {offsets = [56, 0], sizes = [8, 128], strides = [1, 1]} : vector<64x128xf32> to vector<8x128xf32>
    %c0_77 = arith.constant 0 : index
    %c0_78 = arith.constant 0 : index
    %308 = vector.load %arg2[%c0_77, %c0_78] : memref<32x128xf32, #tpu.memory_space<vmem>>, vector<32x128xf32>
    %cst_79 = arith.constant dense<0.000000e+00> : vector<8x128xf32>
    %309 = tpu.matmul %283, %308, %cst_79 {dimension_numbers = #tpu.dot_dimension_numbers<[1], [0], [0], [1], [0, 0, 1, 1], [], []>} : vector<8x32xf32>, vector<32x128xf32>, vector<8x128xf32> -> vector<8x128xf32>
    %310 = arith.addf %307, %309 : vector<8x128xf32>
    %311 = arith.mulf %310, %14 : vector<8x128xf32>
    %312 = arith.negf %311 : vector<8x128xf32>
    %313 = math.exp %312 : vector<8x128xf32>
    %cst_80 = arith.constant 1.000000e+00 : f32
    %314 = vector.broadcast %cst_80 : f32 to vector<8x128xf32>
    %315 = arith.addf %314, %313 : vector<8x128xf32>
    %316 = arith.divf %314, %315 : vector<8x128xf32>
    %317 = arith.mulf %316, %14 : vector<8x128xf32>
    %318 = arith.subf %317, %17 : vector<8x128xf32>
    %319 = vector.extract_strided_slice %318 {offsets = [0, 0], sizes = [8, 32], strides = [1, 1]} : vector<8x128xf32> to vector<8x32xf32>
    %320 = vector.extract_strided_slice %318 {offsets = [0, 32], sizes = [8, 32], strides = [1, 1]} : vector<8x128xf32> to vector<8x32xf32>
    %321 = vector.extract_strided_slice %318 {offsets = [0, 64], sizes = [8, 32], strides = [1, 1]} : vector<8x128xf32> to vector<8x32xf32>
    %322 = vector.extract_strided_slice %318 {offsets = [0, 96], sizes = [8, 32], strides = [1, 1]} : vector<8x128xf32> to vector<8x32xf32>
    %323 = arith.mulf %320, %281 : vector<8x32xf32>
    %324 = arith.mulf %319, %321 : vector<8x32xf32>
    %325 = arith.addf %323, %324 : vector<8x32xf32>
    %326 = math.tanh %325 : vector<8x32xf32>
    %327 = arith.mulf %322, %326 : vector<8x32xf32>
    %328 = tpu.concatenate %283, %306 in 1 : vector<8x32xf32>, vector<8x32xf32> -> vector<8x64xf32>
    %c0_81 = arith.constant 0 : index
    %c0_82 = arith.constant 0 : index
    %329 = vector.load %arg4[%c0_81, %c0_82] : memref<64x128xf32, #tpu.memory_space<vmem>>, vector<64x128xf32>
    %cst_83 = arith.constant dense<0.000000e+00> : vector<8x128xf32>
    %330 = tpu.matmul %328, %329, %cst_83 {dimension_numbers = #tpu.dot_dimension_numbers<[1], [0], [0], [1], [0, 0, 1, 1], [], []>} : vector<8x64xf32>, vector<64x128xf32>, vector<8x128xf32> -> vector<8x128xf32>
    %c0_84 = arith.constant 0 : index
    %c0_85 = arith.constant 0 : index
    %331 = vector.load %arg5[%c0_84, %c0_85] : memref<1x128xf32, #tpu.memory_space<vmem>>, vector<1x128xf32>
    %332 = vector.broadcast %331 : vector<1x128xf32> to vector<8x128xf32>
    %333 = arith.addf %330, %332 : vector<8x128xf32>
    %334 = arith.mulf %333, %14 : vector<8x128xf32>
    %335 = arith.negf %334 : vector<8x128xf32>
    %336 = math.exp %335 : vector<8x128xf32>
    %cst_86 = arith.constant 1.000000e+00 : f32
    %337 = vector.broadcast %cst_86 : f32 to vector<8x128xf32>
    %338 = arith.addf %337, %336 : vector<8x128xf32>
    %339 = arith.divf %337, %338 : vector<8x128xf32>
    %340 = arith.mulf %339, %14 : vector<8x128xf32>
    %341 = arith.subf %340, %17 : vector<8x128xf32>
    %342 = vector.extract_strided_slice %341 {offsets = [0, 0], sizes = [8, 32], strides = [1, 1]} : vector<8x128xf32> to vector<8x32xf32>
    %343 = vector.extract_strided_slice %341 {offsets = [0, 32], sizes = [8, 32], strides = [1, 1]} : vector<8x128xf32> to vector<8x32xf32>
    %344 = vector.extract_strided_slice %341 {offsets = [0, 64], sizes = [8, 32], strides = [1, 1]} : vector<8x128xf32> to vector<8x32xf32>
    %345 = vector.extract_strided_slice %341 {offsets = [0, 96], sizes = [8, 32], strides = [1, 1]} : vector<8x128xf32> to vector<8x32xf32>
    %346 = arith.mulf %343, %304 : vector<8x32xf32>
    %347 = arith.mulf %342, %344 : vector<8x32xf32>
    %348 = arith.addf %346, %347 : vector<8x32xf32>
    %349 = math.tanh %348 : vector<8x32xf32>
    %350 = arith.mulf %345, %349 : vector<8x32xf32>
    %351 = tpu.concatenate %327, %350 in 1 : vector<8x32xf32>, vector<8x32xf32> -> vector<8x64xf32>
    %c0_87 = arith.constant 0 : index
    %c0_88 = arith.constant 0 : index
    %352 = vector.load %arg4[%c0_87, %c0_88] : memref<64x128xf32, #tpu.memory_space<vmem>>, vector<64x128xf32>
    %cst_89 = arith.constant dense<0.000000e+00> : vector<8x128xf32>
    %353 = tpu.matmul %351, %352, %cst_89 {dimension_numbers = #tpu.dot_dimension_numbers<[1], [0], [0], [1], [0, 0, 1, 1], [], []>} : vector<8x64xf32>, vector<64x128xf32>, vector<8x128xf32> -> vector<8x128xf32>
    %c0_90 = arith.constant 0 : index
    %c0_91 = arith.constant 0 : index
    %354 = vector.load %arg5[%c0_90, %c0_91] : memref<1x128xf32, #tpu.memory_space<vmem>>, vector<1x128xf32>
    %355 = vector.broadcast %354 : vector<1x128xf32> to vector<8x128xf32>
    %356 = arith.addf %353, %355 : vector<8x128xf32>
    %357 = arith.mulf %356, %14 : vector<8x128xf32>
    %358 = arith.negf %357 : vector<8x128xf32>
    %359 = math.exp %358 : vector<8x128xf32>
    %cst_92 = arith.constant 1.000000e+00 : f32
    %360 = vector.broadcast %cst_92 : f32 to vector<8x128xf32>
    %361 = arith.addf %360, %359 : vector<8x128xf32>
    %362 = arith.divf %360, %361 : vector<8x128xf32>
    %363 = arith.mulf %362, %14 : vector<8x128xf32>
    %364 = arith.subf %363, %17 : vector<8x128xf32>
    %365 = vector.extract_strided_slice %364 {offsets = [0, 0], sizes = [8, 32], strides = [1, 1]} : vector<8x128xf32> to vector<8x32xf32>
    %366 = vector.extract_strided_slice %364 {offsets = [0, 32], sizes = [8, 32], strides = [1, 1]} : vector<8x128xf32> to vector<8x32xf32>
    %367 = vector.extract_strided_slice %364 {offsets = [0, 64], sizes = [8, 32], strides = [1, 1]} : vector<8x128xf32> to vector<8x32xf32>
    %368 = vector.extract_strided_slice %364 {offsets = [0, 96], sizes = [8, 32], strides = [1, 1]} : vector<8x128xf32> to vector<8x32xf32>
    %369 = arith.mulf %366, %348 : vector<8x32xf32>
    %370 = arith.mulf %365, %367 : vector<8x32xf32>
    %371 = arith.addf %369, %370 : vector<8x32xf32>
    %372 = math.tanh %371 : vector<8x32xf32>
    %373 = arith.mulf %368, %372 : vector<8x32xf32>
    %c0_93 = arith.constant 0 : index
    %c0_94 = arith.constant 0 : index
    %374 = vector.load %arg6[%c0_93, %c0_94] : memref<32x1xf32, #tpu.memory_space<vmem>>, vector<32x1xf32>
    %cst_95 = arith.constant dense<0.000000e+00> : vector<8x1xf32>
    %375 = tpu.matmul %373, %374, %cst_95 {dimension_numbers = #tpu.dot_dimension_numbers<[1], [0], [0], [1], [0, 0, 1, 1], [], []>} : vector<8x32xf32>, vector<32x1xf32>, vector<8x1xf32> -> vector<8x1xf32>
    %c0_96 = arith.constant 0 : index
    %c0_97 = arith.constant 0 : index
    %376 = vector.load %arg7[%c0_96, %c0_97] : memref<1x1xf32, #tpu.memory_space<vmem>>, vector<1x1xf32>
    %377 = vector.broadcast %376 : vector<1x1xf32> to vector<8x1xf32>
    %378 = arith.addf %375, %377 : vector<8x1xf32>
    %c0_98 = arith.constant 0 : index
    %c0_99 = arith.constant 0 : index
    %379 = vector.load %arg8[%c0_98, %c0_99] : memref<8x1xf32, #tpu.memory_space<vmem>>, vector<8x1xf32>
    tpu.vector_store %arg8[%c0_98, %c0_99], %378 {strides = array<i32>} : memref<8x1xf32, #tpu.memory_space<vmem>>, vector<8x1xf32>,
    return
  }
}

</mosaic_0001>

<llo_original>
// kernel: rnn_forward.1
$region0: #{rnn_forward.1}
  #allocation0 [shape = 'u32[]', space=smem, size = 0x4, offset = 0x4, fixed_abs, tag = 'smem constant byte address 0x4 - core index']
  #allocation1 [shape = 'u32[144,128]{1,0:T(1,128)}', space=vmem, size = 0x12000, scoped, tag = 'internal scratch']
  #allocation2 [shape = 'f32[1,1]{1,0:T(1,128)S(1)}', space=vmem, size = 0x200, scoped, tag = 'scoped memory for rnn_forward.1']
  %s0 = inlined_call_operand.vmem [shape: f32[64,8], index: 0, kind: input, shape index: {}]
  %s1 = inlined_call_operand.vmem [shape: f32[8,128], index: 1, kind: input, shape index: {}]
  %s2 = inlined_call_operand.vmem [shape: f32[32,128], index: 2, kind: input, shape index: {}]
  %s3 = inlined_call_operand.vmem [shape: f32[1,128], index: 3, kind: input, shape index: {}]
  %s4 = inlined_call_operand.vmem [shape: f32[64,128], index: 4, kind: input, shape index: {}]
  %s5 = inlined_call_operand.vmem [shape: f32[1,128], index: 5, kind: input, shape index: {}]
  %s6 = inlined_call_operand.vmem [shape: f32[32,1], index: 6, kind: input, shape index: {}]
  %s7 = inlined_call_operand.<no memory space> [shape: f32[1,1], index: 7, kind: input, shape index: {}]
  %s8 = inlined_call_operand.vmem [shape: f32[8,1], index: 8, kind: output, shape index: {}]
  %s9 = sld [smem:[#allocation0]]
  $region42: #{rnn_forward.1} parent=0
    _
  %s11 = ssub.s32 1, %s9
  %s12 = scalar_select 0, %s11, %s9
  %v13 = vstv %s7
  %14 = vst [vmem:[#allocation2] sm:$0x1] %v13
  // Predicated region
  $region2: #{rnn_forward.1} parent=0 // pred_check
    _
  $region3: #{rnn_forward.1} parent=0 // pred_check_branch
    %16 = sbr.rel (0) target = $region5
  $region4: #{rnn_forward.1} parent=0 // pred_region
    _
  $region5: #{rnn_forward.1} parent=0 // pred_fallthru
    _
  // Predicated region
  $region6: #{rnn_forward.1} parent=0 // pred_check
    _
  $region7: #{rnn_forward.1} parent=0 // pred_check_branch
    %18 = sbr.rel (0) target = $region9
  $region8: #{rnn_forward.1} parent=0 // pred_region
    _
  $region9: #{rnn_forward.1} parent=0 // pred_fallthru
    _
  // Predicated region
  $region10: #{rnn_forward.1} parent=0 // pred_check
    _
  $region11: #{rnn_forward.1} parent=0 // pred_check_branch
    %20 = sbr.rel (0) target = $region13
  $region12: #{rnn_forward.1} parent=0 // pred_region
    _
  $region13: #{rnn_forward.1} parent=0 // pred_fallthru
    _
  // Predicated region
  $region14: #{rnn_forward.1} parent=0 // pred_check
    _
  $region15: #{rnn_forward.1} parent=0 // pred_check_branch
    %22 = sbr.rel (0) target = $region17
  $region16: #{rnn_forward.1} parent=0 // pred_region
    _
  $region17: #{rnn_forward.1} parent=0 // pred_fallthru
    _
  // Predicated region
  $region18: #{rnn_forward.1} parent=0 // pred_check
    _
  $region19: #{rnn_forward.1} parent=0 // pred_check_branch
    %24 = sbr.rel (0) target = $region21
  $region20: #{rnn_forward.1} parent=0 // pred_region
    _
  $region21: #{rnn_forward.1} parent=0 // pred_fallthru
    _
  // Predicated region
  $region22: #{rnn_forward.1} parent=0 // pred_check
    _
  $region23: #{rnn_forward.1} parent=0 // pred_check_branch
    %26 = sbr.rel (0) target = $region25
  $region24: #{rnn_forward.1} parent=0 // pred_region
    _
  $region25: #{rnn_forward.1} parent=0 // pred_fallthru
    _
  // Predicated region
  $region26: #{rnn_forward.1} parent=0 // pred_check
    _
  $region27: #{rnn_forward.1} parent=0 // pred_check_branch
    %28 = sbr.rel (0) target = $region29
  $region28: #{rnn_forward.1} parent=0 // pred_region
    _
  $region29: #{rnn_forward.1} parent=0 // pred_fallthru
    _
  // Predicated region
  $region30: #{rnn_forward.1} parent=0 // pred_check
    _
  $region31: #{rnn_forward.1} parent=0 // pred_check_branch
    %30 = sbr.rel (0) target = $region33
  $region32: #{rnn_forward.1} parent=0 // pred_region
    _
  $region33: #{rnn_forward.1} parent=0 // pred_fallthru
    _
  %v31 = vld [vmem:[%s0] sm:$0xff]
  %v32 = vld [vmem:[%s0 + $0x8] sm:$0xff]
  %v33 = vld [vmem:[%s0 + $0x10] sm:$0xff]
  %v34 = vld [vmem:[%s0 + $0x18] sm:$0xff]
  %v35 = vld [vmem:[%s0 + $0x20] sm:$0xff]
  %v36 = vld [vmem:[%s0 + $0x28] sm:$0xff]
  %v37 = vld [vmem:[%s0 + $0x30] sm:$0xff]
  %v38 = vld [vmem:[%s0 + $0x38] sm:$0xff]
  %v39 = vld [vmem:[%s1] sm:$0xff]
  %v40 = vld [vmem:[%s3] sm:$0x1]
  %v42 = vlaneseq
  %v43 = vshrl.u32 %v42, 7
  %v44 = vsub.s32 0, %v43
  %v45 = vrot.slane %v40, %v44
  %vm47 = vcmask 64512
  %v49 = vsel %vm47, %v31, 0
  %v52 = vsel %vm47, %v32, 0
  %v55 = vsel %vm47, %v33, 0
  %v58 = vsel %vm47, %v34, 0
  %v61 = vsel %vm47, %v35, 0
  %v64 = vsel %vm47, %v36, 0
  %v67 = vsel %vm47, %v37, 0
  %v70 = vsel %vm47, %v38, 0
  %72 = vmatprep.subr.mxu0 0.0
  %73 = vmatpush1.msra.mxu0 0.0
  %74 = vmatprep.subr.mxu0 0.0
  %75 = vmatpush1.msra.mxu0 0.0
  %76 = vmatprep.subr.mxu0 0.0
  %77 = vmatpush1.msra.mxu0 0.0
  %78 = vmatprep.subr.mxu0 0.0
  %79 = vmatpush1.msra.mxu0 0.0
  %80 = vmatprep.subr.mxu0 0.0
  %81 = vmatpush1.msra.mxu0 0.0
  %82 = vmatprep.subr.mxu0 0.0
  %83 = vmatpush1.msra.mxu0 0.0
  %84 = vmatprep.subr.mxu0 0.0
  %85 = vmatpush1.msra.mxu0 0.0
  %86 = vmatprep.subr.mxu0 0.0
  %87 = vmatpush1.msra.mxu0 0.0
  %88 = vmatprep.subr.mxu0 0.0
  %89 = vmatpush1.msra.mxu0 0.0
  %90 = vmatprep.subr.mxu0 0.0
  %91 = vmatpush1.msra.mxu0 0.0
  %92 = vmatprep.subr.mxu0 0.0
  %93 = vmatpush1.msra.mxu0 0.0
  %94 = vmatprep.subr.mxu0 0.0
  %95 = vmatpush1.msra.mxu0 0.0
  %96 = vmatprep.subr.mxu0 0.0
  %97 = vmatpush1.msra.mxu0 0.0
  %98 = vmatprep.subr.mxu0 0.0
  %99 = vmatpush1.msra.mxu0 0.0
  %100 = vmatprep.subr.mxu0 0.0
  %101 = vmatpush1.msra.mxu0 0.0
  %102 = vmatprep.subr.mxu0 0.0
  %103 = vmatpush1.msra.mxu0 %v39
  %104 = vmatprep.subr.mxu0 0.0
  %105 = vmatpush2.msra.mxu0 0.0
  %106 = vmatprep.subr.mxu0 0.0
  %107 = vmatpush2.msra.mxu0 0.0
  %108 = vmatprep.subr.mxu0 0.0
  %109 = vmatpush2.msra.mxu0 0.0
  %110 = vmatprep.subr.mxu0 0.0
  %111 = vmatpush2.msra.mxu0 0.0
  %112 = vmatprep.subr.mxu0 0.0
  %113 = vmatpush2.msra.mxu0 0.0
  %114 = vmatprep.subr.mxu0 0.0
  %115 = vmatpush2.msra.mxu0 0.0
  %116 = vmatprep.subr.mxu0 0.0
  %117 = vmatpush2.msra.mxu0 0.0
  %118 = vmatprep.subr.mxu0 0.0
  %119 = vmatpush2.msra.mxu0 0.0
  %120 = vmatprep.subr.mxu0 0.0
  %121 = vmatpush2.msra.mxu0 0.0
  %122 = vmatprep.subr.mxu0 0.0
  %123 = vmatpush2.msra.mxu0 0.0
  %124 = vmatprep.subr.mxu0 0.0
  %125 = vmatpush2.msra.mxu0 0.0
  %126 = vmatprep.subr.mxu0 0.0
  %127 = vmatpush2.msra.mxu0 0.0
  %128 = vmatprep.subr.mxu0 0.0
  %129 = vmatpush2.msra.mxu0 0.0
  %130 = vmatprep.subr.mxu0 0.0
  %131 = vmatpush2.msra.mxu0 0.0
  %132 = vmatprep.subr.mxu0 0.0
  %133 = vmatpush2.msra.mxu0 0.0
  %134 = vmatprep.subr.mxu0 0.0
  %135 = vmatpush2.msra.mxu0 0.0
  %136 = vmatprep.mubr.f32.mxu0 0.0
  %137 = vmatmul.mubr.f32.gmra.mxu0 %v49
  %v138 = vpop.f32.mrf.mxu0
  %v139 = vadd.f32 %v45, %v138
  %v140 = vpop.f32.mrf.mxu0
  %141 = vmatprep.mubr.f32.mxu0 0.0
  %142 = vmatmul.mubr.f32.gmra.mxu0 %v52
  %v143 = vpop.f32.mrf.mxu0
  %v144 = vadd.f32 %v45, %v143
  %v145 = vpop.f32.mrf.mxu0
  %146 = vmatprep.mubr.f32.mxu0 0.0
  %147 = vmatmul.mubr.f32.gmra.mxu0 %v55
  %v148 = vpop.f32.mrf.mxu0
  %v149 = vadd.f32 %v45, %v148
  %v150 = vpop.f32.mrf.mxu0
  %151 = vmatprep.mubr.f32.mxu0 0.0
  %152 = vmatmul.mubr.f32.gmra.mxu0 %v58
  %v153 = vpop.f32.mrf.mxu0
  %v154 = vadd.f32 %v45, %v153
  %v155 = vpop.f32.mrf.mxu0
  %156 = vmatprep.mubr.f32.mxu0 0.0
  %157 = vmatmul.mubr.f32.gmra.mxu0 %v61
  %v158 = vpop.f32.mrf.mxu0
  %v159 = vadd.f32 %v45, %v158
  %v160 = vpop.f32.mrf.mxu0
  %161 = vmatprep.mubr.f32.mxu0 0.0
  %162 = vmatmul.mubr.f32.gmra.mxu0 %v64
  %v163 = vpop.f32.mrf.mxu0
  %v164 = vadd.f32 %v45, %v163
  %v165 = vpop.f32.mrf.mxu0
  %166 = vmatprep.mubr.f32.mxu0 0.0
  %167 = vmatmul.mubr.f32.gmra.mxu0 %v67
  %v168 = vpop.f32.mrf.mxu0
  %v169 = vadd.f32 %v45, %v168
  %v170 = vpop.f32.mrf.mxu0
  %171 = vmatprep.mubr.f32.mxu0 0.0
  %172 = vmatmul.mubr.f32.gmra.mxu0 %v70
  %v173 = vpop.f32.mrf.mxu0
  %v174 = vadd.f32 %v45, %v173
  %v175 = vpop.f32.mrf.mxu0
  %176 = vdwg.mxu0
  %v177 = vlaneseq
  %v178 = vand.u32 %v177, 127
  %vm179 = vcmp.ge.s32.totalorder %v178, 64
  %vm180 = vcmp.lt.s32.totalorder %v178, 96
  %vm181 = vmand %vm179, %vm180
  %v182 = vsel %vm181, 2.0, 1.0
  %v183 = vsel %vm181, 1.0, 0.0
  %v184 = vld [vmem:[%s2] sm:$0xff]
  %v185 = vld [vmem:[%s2 + $0x8] sm:$0xff]
  %v186 = vld [vmem:[%s2 + $0x10] sm:$0xff]
  %v187 = vld [vmem:[%s2 + $0x18] sm:$0xff]
  %vm188 = vcmask 261120
  %v190 = vsel %vm188, 0.0, 0
  %192 = vmatprep.subr.mxu0 0.0
  %193 = vmatpush1.msra.mxu0 0.0
  %194 = vmatprep.subr.mxu0 0.0
  %195 = vmatpush1.msra.mxu0 0.0
  %196 = vmatprep.subr.mxu0 0.0
  %197 = vmatpush1.msra.mxu0 0.0
  %198 = vmatprep.subr.mxu0 0.0
  %199 = vmatpush1.msra.mxu0 0.0
  %200 = vmatprep.subr.mxu0 0.0
  %201 = vmatpush1.msra.mxu0 0.0
  %202 = vmatprep.subr.mxu0 0.0
  %203 = vmatpush1.msra.mxu0 0.0
  %204 = vmatprep.subr.mxu0 0.0
  %205 = vmatpush1.msra.mxu0 0.0
  %206 = vmatprep.subr.mxu0 0.0
  %207 = vmatpush1.msra.mxu0 0.0
  %208 = vmatprep.subr.mxu0 0.0
  %209 = vmatpush1.msra.mxu0 0.0
  %210 = vmatprep.subr.mxu0 0.0
  %211 = vmatpush1.msra.mxu0 0.0
  %212 = vmatprep.subr.mxu0 0.0
  %213 = vmatpush1.msra.mxu0 0.0
  %214 = vmatprep.subr.mxu0 0.0
  %215 = vmatpush1.msra.mxu0 0.0
  %216 = vmatprep.subr.mxu0 0.0
  %217 = vmatpush1.msra.mxu0 %v187
  %218 = vmatprep.subr.mxu0 0.0
  %219 = vmatpush1.msra.mxu0 %v186
  %220 = vmatprep.subr.mxu0 0.0
  %221 = vmatpush1.msra.mxu0 %v185
  %222 = vmatprep.subr.mxu0 0.0
  %223 = vmatpush1.msra.mxu0 %v184
  %224 = vmatprep.subr.mxu0 0.0
  %225 = vmatpush2.msra.mxu0 0.0
  %226 = vmatprep.subr.mxu0 0.0
  %227 = vmatpush2.msra.mxu0 0.0
  %228 = vmatprep.subr.mxu0 0.0
  %229 = vmatpush2.msra.mxu0 0.0
  %230 = vmatprep.subr.mxu0 0.0
  %231 = vmatpush2.msra.mxu0 0.0
  %232 = vmatprep.subr.mxu0 0.0
  %233 = vmatpush2.msra.mxu0 0.0
  %234 = vmatprep.subr.mxu0 0.0
  %235 = vmatpush2.msra.mxu0 0.0
  %236 = vmatprep.subr.mxu0 0.0
  %237 = vmatpush2.msra.mxu0 0.0
  %238 = vmatprep.subr.mxu0 0.0
  %239 = vmatpush2.msra.mxu0 0.0
  %240 = vmatprep.subr.mxu0 0.0
  %241 = vmatpush2.msra.mxu0 0.0
  %242 = vmatprep.subr.mxu0 0.0
  %243 = vmatpush2.msra.mxu0 0.0
  %244 = vmatprep.subr.mxu0 0.0
  %245 = vmatpush2.msra.mxu0 0.0
  %246 = vmatprep.subr.mxu0 0.0
  %247 = vmatpush2.msra.mxu0 0.0
  %248 = vmatprep.subr.mxu0 0.0
  %249 = vmatpush2.msra.mxu0 0.0
  %250 = vmatprep.subr.mxu0 0.0
  %251 = vmatpush2.msra.mxu0 0.0
  %252 = vmatprep.subr.mxu0 0.0
  %253 = vmatpush2.msra.mxu0 0.0
  %254 = vmatprep.subr.mxu0 0.0
  %255 = vmatpush2.msra.mxu0 0.0
  %256 = vmatprep.mubr.f32.mxu0 0.0
  %257 = vmatmul.mubr.f32.gmra.mxu0 %v190
  %v258 = vpop.f32.mrf.mxu0
  %v259 = vadd.f32 0.0, %v258
  %v260 = vpop.f32.mrf.mxu0
  %261 = vdwg.mxu0
  %v262 = vadd.f32 %v139, %v259
  %v263 = vmul.f32 %v262, %v182
  %v264 = vxor.u32 %v263, 2147483648
  %v265 = vmul.f32 %v264, 1.442695
  %v266 = vpow.pop %v265
  %v267 = vadd.f32 %v266, 1.0
  %v268 = vrcp.pop %v267
  %v269 = vmul.f32 1.0, %v268
  %v270 = vmul.f32 %v269, %v182
  %v271 = vsub.f32 %v270, %v183
  %v272 = vmul.f32 %v271, 0.0
  %274 = vrot.lane.b32.xlu0 %v271, 64
  %v275 = vpop.permute.xlu0 %274
  %v277 = vmul.f32 %v271, %v275
  %279 = vrot.lane.b32.xlu0 %v277, 32
  %v280 = vpop.permute.xlu0 %279
  %v282 = vadd.f32 %v272, %v280
  %v283 = vtanh.pop %v282
  %285 = vrot.lane.b32.xlu0 %v283, 64
  %v286 = vpop.permute.xlu0 %285
  %v288 = vmul.f32 %v271, %v286
  %290 = vrot.lane.b32.xlu0 %v288, 32
  %v291 = vpop.permute.xlu0 %290
  %v292 = vsel %vm188, %v291, 0
  %294 = vmatprep.subr.mxu0 0.0
  %295 = vmatpush1.msra.mxu0 0.0
  %296 = vmatprep.subr.mxu0 0.0
  %297 = vmatpush1.msra.mxu0 0.0
  %298 = vmatprep.subr.mxu0 0.0
  %299 = vmatpush1.msra.mxu0 0.0
  %300 = vmatprep.subr.mxu0 0.0
  %301 = vmatpush1.msra.mxu0 0.0
  %302 = vmatprep.subr.mxu0 0.0
  %303 = vmatpush1.msra.mxu0 0.0
  %304 = vmatprep.subr.mxu0 0.0
  %305 = vmatpush1.msra.mxu0 0.0
  %306 = vmatprep.subr.mxu0 0.0
  %307 = vmatpush1.msra.mxu0 0.0
  %308 = vmatprep.subr.mxu0 0.0
  %309 = vmatpush1.msra.mxu0 0.0
  %310 = vmatprep.subr.mxu0 0.0
  %311 = vmatpush1.msra.mxu0 0.0
  %312 = vmatprep.subr.mxu0 0.0
  %313 = vmatpush1.msra.mxu0 0.0
  %314 = vmatprep.subr.mxu0 0.0
  %315 = vmatpush1.msra.mxu0 0.0
  %316 = vmatprep.subr.mxu0 0.0
  %317 = vmatpush1.msra.mxu0 0.0
  %318 = vmatprep.subr.mxu0 0.0
  %319 = vmatpush1.msra.mxu0 %v187
  %320 = vmatprep.subr.mxu0 0.0
  %321 = vmatpush1.msra.mxu0 %v186
  %322 = vmatprep.subr.mxu0 0.0
  %323 = vmatpush1.msra.mxu0 %v185
  %324 = vmatprep.subr.mxu0 0.0
  %325 = vmatpush1.msra.mxu0 %v184
  %326 = vmatprep.subr.mxu0 0.0
  %327 = vmatpush2.msra.mxu0 0.0
  %328 = vmatprep.subr.mxu0 0.0
  %329 = vmatpush2.msra.mxu0 0.0
  %330 = vmatprep.subr.mxu0 0.0
  %331 = vmatpush2.msra.mxu0 0.0
  %332 = vmatprep.subr.mxu0 0.0
  %333 = vmatpush2.msra.mxu0 0.0
  %334 = vmatprep.subr.mxu0 0.0
  %335 = vmatpush2.msra.mxu0 0.0
  %336 = vmatprep.subr.mxu0 0.0
  %337 = vmatpush2.msra.mxu0 0.0
  %338 = vmatprep.subr.mxu0 0.0
  %339 = vmatpush2.msra.mxu0 0.0
  %340 = vmatprep.subr.mxu0 0.0
  %341 = vmatpush2.msra.mxu0 0.0
  %342 = vmatprep.subr.mxu0 0.0
  %343 = vmatpush2.msra.mxu0 0.0
  %344 = vmatprep.subr.mxu0 0.0
  %345 = vmatpush2.msra.mxu0 0.0
  %346 = vmatprep.subr.mxu0 0.0
  %347 = vmatpush2.msra.mxu0 0.0
  %348 = vmatprep.subr.mxu0 0.0
  %349 = vmatpush2.msra.mxu0 0.0
  %350 = vmatprep.subr.mxu0 0.0
  %351 = vmatpush2.msra.mxu0 0.0
  %352 = vmatprep.subr.mxu0 0.0
  %353 = vmatpush2.msra.mxu0 0.0
  %354 = vmatprep.subr.mxu0 0.0
  %355 = vmatpush2.msra.mxu0 0.0
  %356 = vmatprep.subr.mxu0 0.0
  %357 = vmatpush2.msra.mxu0 0.0
  %358 = vmatprep.mubr.f32.mxu0 0.0
  %359 = vmatmul.mubr.f32.gmra.mxu0 %v292
  %v360 = vpop.f32.mrf.mxu0
  %v361 = vadd.f32 0.0, %v360
  %v362 = vpop.f32.mrf.mxu0
  %363 = vdwg.mxu0
  %v364 = vadd.f32 %v144, %v361
  %v365 = vmul.f32 %v364, %v182
  %v366 = vxor.u32 %v365, 2147483648
  %v367 = vmul.f32 %v366, 1.442695
  %v368 = vpow.pop %v367
  %v369 = vadd.f32 %v368, 1.0
  %v370 = vrcp.pop %v369
  %v371 = vmul.f32 1.0, %v370
  %v372 = vmul.f32 %v371, %v182
  %v373 = vsub.f32 %v372, %v183
  %v374 = vmul.f32 %v373, %v282
  %376 = vrot.lane.b32.xlu0 %v373, 64
  %v377 = vpop.permute.xlu0 %376
  %v379 = vmul.f32 %v373, %v377
  %381 = vrot.lane.b32.xlu0 %v379, 32
  %v382 = vpop.permute.xlu0 %381
  %v384 = vadd.f32 %v374, %v382
  %v385 = vtanh.pop %v384
  %387 = vrot.lane.b32.xlu0 %v385, 64
  %v388 = vpop.permute.xlu0 %387
  %v390 = vmul.f32 %v373, %v388
  %v392 = vsel %vm188, %v291, 0.0
  %v393 = vld [vmem:[%s4] sm:$0xff]
  %v394 = vld [vmem:[%s4 + $0x8] sm:$0xff]
  %v395 = vld [vmem:[%s4 + $0x10] sm:$0xff]
  %v396 = vld [vmem:[%s4 + $0x18] sm:$0xff]
  %v397 = vld [vmem:[%s4 + $0x20] sm:$0xff]
  %v398 = vld [vmem:[%s4 + $0x28] sm:$0xff]
  %v399 = vld [vmem:[%s4 + $0x30] sm:$0xff]
  %v400 = vld [vmem:[%s4 + $0x38] sm:$0xff]
  %v401 = vld [vmem:[%s5] sm:$0x1]
  %v403 = vlaneseq
  %v404 = vshrl.u32 %v403, 7
  %v405 = vsub.s32 0, %v404
  %v406 = vrot.slane %v401, %v405
  %vm408 = vcmask 523264
  %v410 = vsel %vm408, %v392, 0
  %412 = vmatprep.subr.mxu0 0.0
  %413 = vmatpush1.msra.mxu0 0.0
  %414 = vmatprep.subr.mxu0 0.0
  %415 = vmatpush1.msra.mxu0 0.0
  %416 = vmatprep.subr.mxu0 0.0
  %417 = vmatpush1.msra.mxu0 0.0
  %418 = vmatprep.subr.mxu0 0.0
  %419 = vmatpush1.msra.mxu0 0.0
  %420 = vmatprep.subr.mxu0 0.0
  %421 = vmatpush1.msra.mxu0 0.0
  %422 = vmatprep.subr.mxu0 0.0
  %423 = vmatpush1.msra.mxu0 0.0
  %424 = vmatprep.subr.mxu0 0.0
  %425 = vmatpush1.msra.mxu0 0.0
  %426 = vmatprep.subr.mxu0 0.0
  %427 = vmatpush1.msra.mxu0 0.0
  %428 = vmatprep.subr.mxu0 0.0
  %429 = vmatpush1.msra.mxu0 %v400
  %430 = vmatprep.subr.mxu0 0.0
  %431 = vmatpush1.msra.mxu0 %v399
  %432 = vmatprep.subr.mxu0 0.0
  %433 = vmatpush1.msra.mxu0 %v398
  %434 = vmatprep.subr.mxu0 0.0
  %435 = vmatpush1.msra.mxu0 %v397
  %436 = vmatprep.subr.mxu0 0.0
  %437 = vmatpush1.msra.mxu0 %v396
  %438 = vmatprep.subr.mxu0 0.0
  %439 = vmatpush1.msra.mxu0 %v395
  %440 = vmatprep.subr.mxu0 0.0
  %441 = vmatpush1.msra.mxu0 %v394
  %442 = vmatprep.subr.mxu0 0.0
  %443 = vmatpush1.msra.mxu0 %v393
  %444 = vmatprep.subr.mxu0 0.0
  %445 = vmatpush2.msra.mxu0 0.0
  %446 = vmatprep.subr.mxu0 0.0
  %447 = vmatpush2.msra.mxu0 0.0
  %448 = vmatprep.subr.mxu0 0.0
  %449 = vmatpush2.msra.mxu0 0.0
  %450 = vmatprep.subr.mxu0 0.0
  %451 = vmatpush2.msra.mxu0 0.0
  %452 = vmatprep.subr.mxu0 0.0
  %453 = vmatpush2.msra.mxu0 0.0
  %454 = vmatprep.subr.mxu0 0.0
  %455 = vmatpush2.msra.mxu0 0.0
  %456 = vmatprep.subr.mxu0 0.0
  %457 = vmatpush2.msra.mxu0 0.0
  %458 = vmatprep.subr.mxu0 0.0
  %459 = vmatpush2.msra.mxu0 0.0
  %460 = vmatprep.subr.mxu0 0.0
  %461 = vmatpush2.msra.mxu0 0.0
  %462 = vmatprep.subr.mxu0 0.0
  %463 = vmatpush2.msra.mxu0 0.0
  %464 = vmatprep.subr.mxu0 0.0
  %465 = vmatpush2.msra.mxu0 0.0
  %466 = vmatprep.subr.mxu0 0.0
  %467 = vmatpush2.msra.mxu0 0.0
  %468 = vmatprep.subr.mxu0 0.0
  %469 = vmatpush2.msra.mxu0 0.0
  %470 = vmatprep.subr.mxu0 0.0
  %471 = vmatpush2.msra.mxu0 0.0
  %472 = vmatprep.subr.mxu0 0.0
  %473 = vmatpush2.msra.mxu0 0.0
  %474 = vmatprep.subr.mxu0 0.0
  %475 = vmatpush2.msra.mxu0 0.0
  %476 = vmatprep.mubr.f32.mxu0 0.0
  %477 = vmatmul.mubr.f32.gmra.mxu0 %v410
  %v478 = vpop.f32.mrf.mxu0
  %v479 = vadd.f32 %v406, %v478
  %v480 = vpop.f32.mrf.mxu0
  %481 = vdwg.mxu0
  %v482 = vmul.f32 %v479, %v182
  %v483 = vxor.u32 %v482, 2147483648
  %v484 = vmul.f32 %v483, 1.442695
  %v485 = vpow.pop %v484
  %v486 = vadd.f32 %v485, 1.0
  %v487 = vrcp.pop %v486
  %v488 = vmul.f32 1.0, %v487
  %v489 = vmul.f32 %v488, %v182
  %v490 = vsub.f32 %v489, %v183
  %v491 = vmul.f32 %v490, 0.0
  %493 = vrot.lane.b32.xlu0 %v490, 64
  %v494 = vpop.permute.xlu0 %493
  %v496 = vmul.f32 %v490, %v494
  %498 = vrot.lane.b32.xlu0 %v496, 32
  %v499 = vpop.permute.xlu0 %498
  %v501 = vadd.f32 %v491, %v499
  %v502 = vtanh.pop %v501
  %504 = vrot.lane.b32.xlu0 %v502, 64
  %v505 = vpop.permute.xlu0 %504
  %v507 = vmul.f32 %v490, %v505
  %509 = vrot.lane.b32.xlu0 %v390, 32
  %v510 = vpop.permute.xlu0 %509
  %v511 = vsel %vm188, %v510, 0
  %513 = vmatprep.subr.mxu0 0.0
  %514 = vmatpush1.msra.mxu0 0.0
  %515 = vmatprep.subr.mxu0 0.0
  %516 = vmatpush1.msra.mxu0 0.0
  %517 = vmatprep.subr.mxu0 0.0
  %518 = vmatpush1.msra.mxu0 0.0
  %519 = vmatprep.subr.mxu0 0.0
  %520 = vmatpush1.msra.mxu0 0.0
  %521 = vmatprep.subr.mxu0 0.0
  %522 = vmatpush1.msra.mxu0 0.0
  %523 = vmatprep.subr.mxu0 0.0
  %524 = vmatpush1.msra.mxu0 0.0
  %525 = vmatprep.subr.mxu0 0.0
  %526 = vmatpush1.msra.mxu0 0.0
  %527 = vmatprep.subr.mxu0 0.0
  %528 = vmatpush1.msra.mxu0 0.0
  %529 = vmatprep.subr.mxu0 0.0
  %530 = vmatpush1.msra.mxu0 0.0
  %531 = vmatprep.subr.mxu0 0.0
  %532 = vmatpush1.msra.mxu0 0.0
  %533 = vmatprep.subr.mxu0 0.0
  %534 = vmatpush1.msra.mxu0 0.0
  %535 = vmatprep.subr.mxu0 0.0
  %536 = vmatpush1.msra.mxu0 0.0
  %537 = vmatprep.subr.mxu0 0.0
  %538 = vmatpush1.msra.mxu0 %v187
  %539 = vmatprep.subr.mxu0 0.0
  %540 = vmatpush1.msra.mxu0 %v186
  %541 = vmatprep.subr.mxu0 0.0
  %542 = vmatpush1.msra.mxu0 %v185
  %543 = vmatprep.subr.mxu0 0.0
  %544 = vmatpush1.msra.mxu0 %v184
  %545 = vmatprep.subr.mxu0 0.0
  %546 = vmatpush2.msra.mxu0 0.0
  %547 = vmatprep.subr.mxu0 0.0
  %548 = vmatpush2.msra.mxu0 0.0
  %549 = vmatprep.subr.mxu0 0.0
  %550 = vmatpush2.msra.mxu0 0.0
  %551 = vmatprep.subr.mxu0 0.0
  %552 = vmatpush2.msra.mxu0 0.0
  %553 = vmatprep.subr.mxu0 0.0
  %554 = vmatpush2.msra.mxu0 0.0
  %555 = vmatprep.subr.mxu0 0.0
  %556 = vmatpush2.msra.mxu0 0.0
  %557 = vmatprep.subr.mxu0 0.0
  %558 = vmatpush2.msra.mxu0 0.0
  %559 = vmatprep.subr.mxu0 0.0
  %560 = vmatpush2.msra.mxu0 0.0
  %561 = vmatprep.subr.mxu0 0.0
  %562 = vmatpush2.msra.mxu0 0.0
  %563 = vmatprep.subr.mxu0 0.0
  %564 = vmatpush2.msra.mxu0 0.0
  %565 = vmatprep.subr.mxu0 0.0
  %566 = vmatpush2.msra.mxu0 0.0
  %567 = vmatprep.subr.mxu0 0.0
  %568 = vmatpush2.msra.mxu0 0.0
  %569 = vmatprep.subr.mxu0 0.0
  %570 = vmatpush2.msra.mxu0 0.0
  %571 = vmatprep.subr.mxu0 0.0
  %572 = vmatpush2.msra.mxu0 0.0
  %573 = vmatprep.subr.mxu0 0.0
  %574 = vmatpush2.msra.mxu0 0.0
  %575 = vmatprep.subr.mxu0 0.0
  %576 = vmatpush2.msra.mxu0 0.0
  %577 = vmatprep.mubr.f32.mxu0 0.0
  %578 = vmatmul.mubr.f32.gmra.mxu0 %v511
  %v579 = vpop.f32.mrf.mxu0
  %v580 = vadd.f32 0.0, %v579
  %v581 = vpop.f32.mrf.mxu0
  %582 = vdwg.mxu0
  %v583 = vadd.f32 %v149, %v580
  %v584 = vmul.f32 %v583, %v182
  %v585 = vxor.u32 %v584, 2147483648
  %v586 = vmul.f32 %v585, 1.442695
  %v587 = vpow.pop %v586
  %v588 = vadd.f32 %v587, 1.0
  %v589 = vrcp.pop %v588
  %v590 = vmul.f32 1.0, %v589
  %v591 = vmul.f32 %v590, %v182
  %v592 = vsub.f32 %v591, %v183
  %v593 = vmul.f32 %v592, %v384
  %595 = vrot.lane.b32.xlu0 %v592, 64
  %v596 = vpop.permute.xlu0 %595
  %v598 = vmul.f32 %v592, %v596
  %600 = vrot.lane.b32.xlu0 %v598, 32
  %v601 = vpop.permute.xlu0 %600
  %v603 = vadd.f32 %v593, %v601
  %v604 = vtanh.pop %v603
  %606 = vrot.lane.b32.xlu0 %v604, 64
  %v607 = vpop.permute.xlu0 %606
  %v609 = vmul.f32 %v592, %v607
  %612 = vrot.lane.b32.xlu0 %v507, 64
  %v613 = vpop.permute.xlu0 %612
  %v615 = vsel %vm188, %v510, %v613
  %v617 = vsel %vm408, %v615, 0
  %619 = vmatprep.subr.mxu0 0.0
  %620 = vmatpush1.msra.mxu0 0.0
  %621 = vmatprep.subr.mxu0 0.0
  %622 = vmatpush1.msra.mxu0 0.0
  %623 = vmatprep.subr.mxu0 0.0
  %624 = vmatpush1.msra.mxu0 0.0
  %625 = vmatprep.subr.mxu0 0.0
  %626 = vmatpush1.msra.mxu0 0.0
  %627 = vmatprep.subr.mxu0 0.0
  %628 = vmatpush1.msra.mxu0 0.0
  %629 = vmatprep.subr.mxu0 0.0
  %630 = vmatpush1.msra.mxu0 0.0
  %631 = vmatprep.subr.mxu0 0.0
  %632 = vmatpush1.msra.mxu0 0.0
  %633 = vmatprep.subr.mxu0 0.0
  %634 = vmatpush1.msra.mxu0 0.0
  %635 = vmatprep.subr.mxu0 0.0
  %636 = vmatpush1.msra.mxu0 %v400
  %637 = vmatprep.subr.mxu0 0.0
  %638 = vmatpush1.msra.mxu0 %v399
  %639 = vmatprep.subr.mxu0 0.0
  %640 = vmatpush1.msra.mxu0 %v398
  %641 = vmatprep.subr.mxu0 0.0
  %642 = vmatpush1.msra.mxu0 %v397
  %643 = vmatprep.subr.mxu0 0.0
  %644 = vmatpush1.msra.mxu0 %v396
  %645 = vmatprep.subr.mxu0 0.0
  %646 = vmatpush1.msra.mxu0 %v395
  %647 = vmatprep.subr.mxu0 0.0
  %648 = vmatpush1.msra.mxu0 %v394
  %649 = vmatprep.subr.mxu0 0.0
  %650 = vmatpush1.msra.mxu0 %v393
  %651 = vmatprep.subr.mxu0 0.0
  %652 = vmatpush2.msra.mxu0 0.0
  %653 = vmatprep.subr.mxu0 0.0
  %654 = vmatpush2.msra.mxu0 0.0
  %655 = vmatprep.subr.mxu0 0.0
  %656 = vmatpush2.msra.mxu0 0.0
  %657 = vmatprep.subr.mxu0 0.0
  %658 = vmatpush2.msra.mxu0 0.0
  %659 = vmatprep.subr.mxu0 0.0
  %660 = vmatpush2.msra.mxu0 0.0
  %661 = vmatprep.subr.mxu0 0.0
  %662 = vmatpush2.msra.mxu0 0.0
  %663 = vmatprep.subr.mxu0 0.0
  %664 = vmatpush2.msra.mxu0 0.0
  %665 = vmatprep.subr.mxu0 0.0
  %666 = vmatpush2.msra.mxu0 0.0
  %667 = vmatprep.subr.mxu0 0.0
  %668 = vmatpush2.msra.mxu0 0.0
  %669 = vmatprep.subr.mxu0 0.0
  %670 = vmatpush2.msra.mxu0 0.0
  %671 = vmatprep.subr.mxu0 0.0
  %672 = vmatpush2.msra.mxu0 0.0
  %673 = vmatprep.subr.mxu0 0.0
  %674 = vmatpush2.msra.mxu0 0.0
  %675 = vmatprep.subr.mxu0 0.0
  %676 = vmatpush2.msra.mxu0 0.0
  %677 = vmatprep.subr.mxu0 0.0
  %678 = vmatpush2.msra.mxu0 0.0
  %679 = vmatprep.subr.mxu0 0.0
  %680 = vmatpush2.msra.mxu0 0.0
  %681 = vmatprep.subr.mxu0 0.0
  %682 = vmatpush2.msra.mxu0 0.0
  %683 = vmatprep.mubr.f32.mxu0 0.0
  %684 = vmatmul.mubr.f32.gmra.mxu0 %v617
  %v685 = vpop.f32.mrf.mxu0
  %v686 = vadd.f32 %v406, %v685
  %v687 = vpop.f32.mrf.mxu0
  %688 = vdwg.mxu0
  %v689 = vmul.f32 %v686, %v182
  %v690 = vxor.u32 %v689, 2147483648
  %v691 = vmul.f32 %v690, 1.442695
  %v692 = vpow.pop %v691
  %v693 = vadd.f32 %v692, 1.0
  %v694 = vrcp.pop %v693
  %v695 = vmul.f32 1.0, %v694
  %v696 = vmul.f32 %v695, %v182
  %v697 = vsub.f32 %v696, %v183
  %v698 = vmul.f32 %v697, %v501
  %700 = vrot.lane.b32.xlu0 %v697, 64
  %v701 = vpop.permute.xlu0 %700
  %v703 = vmul.f32 %v697, %v701
  %705 = vrot.lane.b32.xlu0 %v703, 32
  %v706 = vpop.permute.xlu0 %705
  %v708 = vadd.f32 %v698, %v706
  %v709 = vtanh.pop %v708
  %711 = vrot.lane.b32.xlu0 %v709, 64
  %v712 = vpop.permute.xlu0 %711
  %v714 = vmul.f32 %v697, %v712
  %716 = vrot.lane.b32.xlu0 %v609, 32
  %v717 = vpop.permute.xlu0 %716
  %v718 = vsel %vm188, %v717, 0
  %720 = vmatprep.subr.mxu0 0.0
  %721 = vmatpush1.msra.mxu0 0.0
  %722 = vmatprep.subr.mxu0 0.0
  %723 = vmatpush1.msra.mxu0 0.0
  %724 = vmatprep.subr.mxu0 0.0
  %725 = vmatpush1.msra.mxu0 0.0
  %726 = vmatprep.subr.mxu0 0.0
  %727 = vmatpush1.msra.mxu0 0.0
  %728 = vmatprep.subr.mxu0 0.0
  %729 = vmatpush1.msra.mxu0 0.0
  %730 = vmatprep.subr.mxu0 0.0
  %731 = vmatpush1.msra.mxu0 0.0
  %732 = vmatprep.subr.mxu0 0.0
  %733 = vmatpush1.msra.mxu0 0.0
  %734 = vmatprep.subr.mxu0 0.0
  %735 = vmatpush1.msra.mxu0 0.0
  %736 = vmatprep.subr.mxu0 0.0
  %737 = vmatpush1.msra.mxu0 0.0
  %738 = vmatprep.subr.mxu0 0.0
  %739 = vmatpush1.msra.mxu0 0.0
  %740 = vmatprep.subr.mxu0 0.0
  %741 = vmatpush1.msra.mxu0 0.0
  %742 = vmatprep.subr.mxu0 0.0
  %743 = vmatpush1.msra.mxu0 0.0
  %744 = vmatprep.subr.mxu0 0.0
  %745 = vmatpush1.msra.mxu0 %v187
  %746 = vmatprep.subr.mxu0 0.0
  %747 = vmatpush1.msra.mxu0 %v186
  %748 = vmatprep.subr.mxu0 0.0
  %749 = vmatpush1.msra.mxu0 %v185
  %750 = vmatprep.subr.mxu0 0.0
  %751 = vmatpush1.msra.mxu0 %v184
  %752 = vmatprep.subr.mxu0 0.0
  %753 = vmatpush2.msra.mxu0 0.0
  %754 = vmatprep.subr.mxu0 0.0
  %755 = vmatpush2.msra.mxu0 0.0
  %756 = vmatprep.subr.mxu0 0.0
  %757 = vmatpush2.msra.mxu0 0.0
  %758 = vmatprep.subr.mxu0 0.0
  %759 = vmatpush2.msra.mxu0 0.0
  %760 = vmatprep.subr.mxu0 0.0
  %761 = vmatpush2.msra.mxu0 0.0
  %762 = vmatprep.subr.mxu0 0.0
  %763 = vmatpush2.msra.mxu0 0.0
  %764 = vmatprep.subr.mxu0 0.0
  %765 = vmatpush2.msra.mxu0 0.0
  %766 = vmatprep.subr.mxu0 0.0
  %767 = vmatpush2.msra.mxu0 0.0
  %768 = vmatprep.subr.mxu0 0.0
  %769 = vmatpush2.msra.mxu0 0.0
  %770 = vmatprep.subr.mxu0 0.0
  %771 = vmatpush2.msra.mxu0 0.0
  %772 = vmatprep.subr.mxu0 0.0
  %773 = vmatpush2.msra.mxu0 0.0
  %774 = vmatprep.subr.mxu0 0.0
  %775 = vmatpush2.msra.mxu0 0.0
  %776 = vmatprep.subr.mxu0 0.0
  %777 = vmatpush2.msra.mxu0 0.0
  %778 = vmatprep.subr.mxu0 0.0
  %779 = vmatpush2.msra.mxu0 0.0
  %780 = vmatprep.subr.mxu0 0.0
  %781 = vmatpush2.msra.mxu0 0.0
  %782 = vmatprep.subr.mxu0 0.0
  %783 = vmatpush2.msra.mxu0 0.0
  %784 = vmatprep.mubr.f32.mxu0 0.0
  %785 = vmatmul.mubr.f32.gmra.mxu0 %v718
  %v786 = vpop.f32.mrf.mxu0
  %v787 = vadd.f32 0.0, %v786
  %v788 = vpop.f32.mrf.mxu0
  %789 = vdwg.mxu0
  %v790 = vadd.f32 %v154, %v787
  %v791 = vmul.f32 %v790, %v182
  %v792 = vxor.u32 %v791, 2147483648
  %v793 = vmul.f32 %v792, 1.442695
  %v794 = vpow.pop %v793
  %v795 = vadd.f32 %v794, 1.0
  %v796 = vrcp.pop %v795
  %v797 = vmul.f32 1.0, %v796
  %v798 = vmul.f32 %v797, %v182
  %v799 = vsub.f32 %v798, %v183
  %v800 = vmul.f32 %v799, %v603
  %802 = vrot.lane.b32.xlu0 %v799, 64
  %v803 = vpop.permute.xlu0 %802
  %v805 = vmul.f32 %v799, %v803
  %807 = vrot.lane.b32.xlu0 %v805, 32
  %v808 = vpop.permute.xlu0 %807
  %v810 = vadd.f32 %v800, %v808
  %v811 = vtanh.pop %v810
  %813 = vrot.lane.b32.xlu0 %v811, 64
  %v814 = vpop.permute.xlu0 %813
  %v816 = vmul.f32 %v799, %v814
  %819 = vrot.lane.b32.xlu0 %v714, 64
  %v820 = vpop.permute.xlu0 %819
  %v822 = vsel %vm188, %v717, %v820
  %v824 = vsel %vm408, %v822, 0
  %826 = vmatprep.subr.mxu0 0.0
  %827 = vmatpush1.msra.mxu0 0.0
  %828 = vmatprep.subr.mxu0 0.0
  %829 = vmatpush1.msra.mxu0 0.0
  %830 = vmatprep.subr.mxu0 0.0
  %831 = vmatpush1.msra.mxu0 0.0
  %832 = vmatprep.subr.mxu0 0.0
  %833 = vmatpush1.msra.mxu0 0.0
  %834 = vmatprep.subr.mxu0 0.0
  %835 = vmatpush1.msra.mxu0 0.0
  %836 = vmatprep.subr.mxu0 0.0
  %837 = vmatpush1.msra.mxu0 0.0
  %838 = vmatprep.subr.mxu0 0.0
  %839 = vmatpush1.msra.mxu0 0.0
  %840 = vmatprep.subr.mxu0 0.0
  %841 = vmatpush1.msra.mxu0 0.0
  %842 = vmatprep.subr.mxu0 0.0
  %843 = vmatpush1.msra.mxu0 %v400
  %844 = vmatprep.subr.mxu0 0.0
  %845 = vmatpush1.msra.mxu0 %v399
  %846 = vmatprep.subr.mxu0 0.0
  %847 = vmatpush1.msra.mxu0 %v398
  %848 = vmatprep.subr.mxu0 0.0
  %849 = vmatpush1.msra.mxu0 %v397
  %850 = vmatprep.subr.mxu0 0.0
  %851 = vmatpush1.msra.mxu0 %v396
  %852 = vmatprep.subr.mxu0 0.0
  %853 = vmatpush1.msra.mxu0 %v395
  %854 = vmatprep.subr.mxu0 0.0
  %855 = vmatpush1.msra.mxu0 %v394
  %856 = vmatprep.subr.mxu0 0.0
  %857 = vmatpush1.msra.mxu0 %v393
  %858 = vmatprep.subr.mxu0 0.0
  %859 = vmatpush2.msra.mxu0 0.0
  %860 = vmatprep.subr.mxu0 0.0
  %861 = vmatpush2.msra.mxu0 0.0
  %862 = vmatprep.subr.mxu0 0.0
  %863 = vmatpush2.msra.mxu0 0.0
  %864 = vmatprep.subr.mxu0 0.0
  %865 = vmatpush2.msra.mxu0 0.0
  %866 = vmatprep.subr.mxu0 0.0
  %867 = vmatpush2.msra.mxu0 0.0
  %868 = vmatprep.subr.mxu0 0.0
  %869 = vmatpush2.msra.mxu0 0.0
  %870 = vmatprep.subr.mxu0 0.0
  %871 = vmatpush2.msra.mxu0 0.0
  %872 = vmatprep.subr.mxu0 0.0
  %873 = vmatpush2.msra.mxu0 0.0
  %874 = vmatprep.subr.mxu0 0.0
  %875 = vmatpush2.msra.mxu0 0.0
  %876 = vmatprep.subr.mxu0 0.0
  %877 = vmatpush2.msra.mxu0 0.0
  %878 = vmatprep.subr.mxu0 0.0
  %879 = vmatpush2.msra.mxu0 0.0
  %880 = vmatprep.subr.mxu0 0.0
  %881 = vmatpush2.msra.mxu0 0.0
  %882 = vmatprep.subr.mxu0 0.0
  %883 = vmatpush2.msra.mxu0 0.0
  %884 = vmatprep.subr.mxu0 0.0
  %885 = vmatpush2.msra.mxu0 0.0
  %886 = vmatprep.subr.mxu0 0.0
  %887 = vmatpush2.msra.mxu0 0.0
  %888 = vmatprep.subr.mxu0 0.0
  %889 = vmatpush2.msra.mxu0 0.0
  %890 = vmatprep.mubr.f32.mxu0 0.0
  %891 = vmatmul.mubr.f32.gmra.mxu0 %v824
  %v892 = vpop.f32.mrf.mxu0
  %v893 = vadd.f32 %v406, %v892
  %v894 = vpop.f32.mrf.mxu0
  %895 = vdwg.mxu0
  %v896 = vmul.f32 %v893, %v182
  %v897 = vxor.u32 %v896, 2147483648
  %v898 = vmul.f32 %v897, 1.442695
  %v899 = vpow.pop %v898
  %v900 = vadd.f32 %v899, 1.0
  %v901 = vrcp.pop %v900
  %v902 = vmul.f32 1.0, %v901
  %v903 = vmul.f32 %v902, %v182
  %v904 = vsub.f32 %v903, %v183
  %v905 = vmul.f32 %v904, %v708
  %907 = vrot.lane.b32.xlu0 %v904, 64
  %v908 = vpop.permute.xlu0 %907
  %v910 = vmul.f32 %v904, %v908
  %912 = vrot.lane.b32.xlu0 %v910, 32
  %v913 = vpop.permute.xlu0 %912
  %v915 = vadd.f32 %v905, %v913
  %v916 = vtanh.pop %v915
  %918 = vrot.lane.b32.xlu0 %v916, 64
  %v919 = vpop.permute.xlu0 %918
  %v921 = vmul.f32 %v904, %v919
  %923 = vrot.lane.b32.xlu0 %v816, 32
  %v924 = vpop.permute.xlu0 %923
  %v925 = vsel %vm188, %v924, 0
  %927 = vmatprep.subr.mxu0 0.0
  %928 = vmatpush1.msra.mxu0 0.0
  %929 = vmatprep.subr.mxu0 0.0
  %930 = vmatpush1.msra.mxu0 0.0
  %931 = vmatprep.subr.mxu0 0.0
  %932 = vmatpush1.msra.mxu0 0.0
  %933 = vmatprep.subr.mxu0 0.0
  %934 = vmatpush1.msra.mxu0 0.0
  %935 = vmatprep.subr.mxu0 0.0
  %936 = vmatpush1.msra.mxu0 0.0
  %937 = vmatprep.subr.mxu0 0.0
  %938 = vmatpush1.msra.mxu0 0.0
  %939 = vmatprep.subr.mxu0 0.0
  %940 = vmatpush1.msra.mxu0 0.0
  %941 = vmatprep.subr.mxu0 0.0
  %942 = vmatpush1.msra.mxu0 0.0
  %943 = vmatprep.subr.mxu0 0.0
  %944 = vmatpush1.msra.mxu0 0.0
  %945 = vmatprep.subr.mxu0 0.0
  %946 = vmatpush1.msra.mxu0 0.0
  %947 = vmatprep.subr.mxu0 0.0
  %948 = vmatpush1.msra.mxu0 0.0
  %949 = vmatprep.subr.mxu0 0.0
  %950 = vmatpush1.msra.mxu0 0.0
  %951 = vmatprep.subr.mxu0 0.0
  %952 = vmatpush1.msra.mxu0 %v187
  %953 = vmatprep.subr.mxu0 0.0
  %954 = vmatpush1.msra.mxu0 %v186
  %955 = vmatprep.subr.mxu0 0.0
  %956 = vmatpush1.msra.mxu0 %v185
  %957 = vmatprep.subr.mxu0 0.0
  %958 = vmatpush1.msra.mxu0 %v184
  %959 = vmatprep.subr.mxu0 0.0
  %960 = vmatpush2.msra.mxu0 0.0
  %961 = vmatprep.subr.mxu0 0.0
  %962 = vmatpush2.msra.mxu0 0.0
  %963 = vmatprep.subr.mxu0 0.0
  %964 = vmatpush2.msra.mxu0 0.0
  %965 = vmatprep.subr.mxu0 0.0
  %966 = vmatpush2.msra.mxu0 0.0
  %967 = vmatprep.subr.mxu0 0.0
  %968 = vmatpush2.msra.mxu0 0.0
  %969 = vmatprep.subr.mxu0 0.0
  %970 = vmatpush2.msra.mxu0 0.0
  %971 = vmatprep.subr.mxu0 0.0
  %972 = vmatpush2.msra.mxu0 0.0
  %973 = vmatprep.subr.mxu0 0.0
  %974 = vmatpush2.msra.mxu0 0.0
  %975 = vmatprep.subr.mxu0 0.0
  %976 = vmatpush2.msra.mxu0 0.0
  %977 = vmatprep.subr.mxu0 0.0
  %978 = vmatpush2.msra.mxu0 0.0
  %979 = vmatprep.subr.mxu0 0.0
  %980 = vmatpush2.msra.mxu0 0.0
  %981 = vmatprep.subr.mxu0 0.0
  %982 = vmatpush2.msra.mxu0 0.0
  %983 = vmatprep.subr.mxu0 0.0
  %984 = vmatpush2.msra.mxu0 0.0
  %985 = vmatprep.subr.mxu0 0.0
  %986 = vmatpush2.msra.mxu0 0.0
  %987 = vmatprep.subr.mxu0 0.0
  %988 = vmatpush2.msra.mxu0 0.0
  %989 = vmatprep.subr.mxu0 0.0
  %990 = vmatpush2.msra.mxu0 0.0
  %991 = vmatprep.mubr.f32.mxu0 0.0
  %992 = vmatmul.mubr.f32.gmra.mxu0 %v925
  %v993 = vpop.f32.mrf.mxu0
  %v994 = vadd.f32 0.0, %v993
  %v995 = vpop.f32.mrf.mxu0
  %996 = vdwg.mxu0
  %v997 = vadd.f32 %v159, %v994
  %v998 = vmul.f32 %v997, %v182
  %v999 = vxor.u32 %v998, 2147483648
  %v1000 = vmul.f32 %v999, 1.442695
  %v1001 = vpow.pop %v1000
  %v1002 = vadd.f32 %v1001, 1.0
  %v1003 = vrcp.pop %v1002
  %v1004 = vmul.f32 1.0, %v1003
  %v1005 = vmul.f32 %v1004, %v182
  %v1006 = vsub.f32 %v1005, %v183
  %v1007 = vmul.f32 %v1006, %v810
  %1009 = vrot.lane.b32.xlu0 %v1006, 64
  %v1010 = vpop.permute.xlu0 %1009
  %v1012 = vmul.f32 %v1006, %v1010
  %1014 = vrot.lane.b32.xlu0 %v1012, 32
  %v1015 = vpop.permute.xlu0 %1014
  %v1017 = vadd.f32 %v1007, %v1015
  %v1018 = vtanh.pop %v1017
  %1020 = vrot.lane.b32.xlu0 %v1018, 64
  %v1021 = vpop.permute.xlu0 %1020
  %v1023 = vmul.f32 %v1006, %v1021
  %1026 = vrot.lane.b32.xlu0 %v921, 64
  %v1027 = vpop.permute.xlu0 %1026
  %v1029 = vsel %vm188, %v924, %v1027
  %v1031 = vsel %vm408, %v1029, 0
  %1033 = vmatprep.subr.mxu0 0.0
  %1034 = vmatpush1.msra.mxu0 0.0
  %1035 = vmatprep.subr.mxu0 0.0
  %1036 = vmatpush1.msra.mxu0 0.0
  %1037 = vmatprep.subr.mxu0 0.0
  %1038 = vmatpush1.msra.mxu0 0.0
  %1039 = vmatprep.subr.mxu0 0.0
  %1040 = vmatpush1.msra.mxu0 0.0
  %1041 = vmatprep.subr.mxu0 0.0
  %1042 = vmatpush1.msra.mxu0 0.0
  %1043 = vmatprep.subr.mxu0 0.0
  %1044 = vmatpush1.msra.mxu0 0.0
  %1045 = vmatprep.subr.mxu0 0.0
  %1046 = vmatpush1.msra.mxu0 0.0
  %1047 = vmatprep.subr.mxu0 0.0
  %1048 = vmatpush1.msra.mxu0 0.0
  %1049 = vmatprep.subr.mxu0 0.0
  %1050 = vmatpush1.msra.mxu0 %v400
  %1051 = vmatprep.subr.mxu0 0.0
  %1052 = vmatpush1.msra.mxu0 %v399
  %1053 = vmatprep.subr.mxu0 0.0
  %1054 = vmatpush1.msra.mxu0 %v398
  %1055 = vmatprep.subr.mxu0 0.0
  %1056 = vmatpush1.msra.mxu0 %v397
  %1057 = vmatprep.subr.mxu0 0.0
  %1058 = vmatpush1.msra.mxu0 %v396
  %1059 = vmatprep.subr.mxu0 0.0
  %1060 = vmatpush1.msra.mxu0 %v395
  %1061 = vmatprep.subr.mxu0 0.0
  %1062 = vmatpush1.msra.mxu0 %v394
  %1063 = vmatprep.subr.mxu0 0.0
  %1064 = vmatpush1.msra.mxu0 %v393
  %1065 = vmatprep.subr.mxu0 0.0
  %1066 = vmatpush2.msra.mxu0 0.0
  %1067 = vmatprep.subr.mxu0 0.0
  %1068 = vmatpush2.msra.mxu0 0.0
  %1069 = vmatprep.subr.mxu0 0.0
  %1070 = vmatpush2.msra.mxu0 0.0
  %1071 = vmatprep.subr.mxu0 0.0
  %1072 = vmatpush2.msra.mxu0 0.0
  %1073 = vmatprep.subr.mxu0 0.0
  %1074 = vmatpush2.msra.mxu0 0.0
  %1075 = vmatprep.subr.mxu0 0.0
  %1076 = vmatpush2.msra.mxu0 0.0
  %1077 = vmatprep.subr.mxu0 0.0
  %1078 = vmatpush2.msra.mxu0 0.0
  %1079 = vmatprep.subr.mxu0 0.0
  %1080 = vmatpush2.msra.mxu0 0.0
  %1081 = vmatprep.subr.mxu0 0.0
  %1082 = vmatpush2.msra.mxu0 0.0
  %1083 = vmatprep.subr.mxu0 0.0
  %1084 = vmatpush2.msra.mxu0 0.0
  %1085 = vmatprep.subr.mxu0 0.0
  %1086 = vmatpush2.msra.mxu0 0.0
  %1087 = vmatprep.subr.mxu0 0.0
  %1088 = vmatpush2.msra.mxu0 0.0
  %1089 = vmatprep.subr.mxu0 0.0
  %1090 = vmatpush2.msra.mxu0 0.0
  %1091 = vmatprep.subr.mxu0 0.0
  %1092 = vmatpush2.msra.mxu0 0.0
  %1093 = vmatprep.subr.mxu0 0.0
  %1094 = vmatpush2.msra.mxu0 0.0
  %1095 = vmatprep.subr.mxu0 0.0
  %1096 = vmatpush2.msra.mxu0 0.0
  %1097 = vmatprep.mubr.f32.mxu0 0.0
  %1098 = vmatmul.mubr.f32.gmra.mxu0 %v1031
  %v1099 = vpop.f32.mrf.mxu0
  %v1100 = vadd.f32 %v406, %v1099
  %v1101 = vpop.f32.mrf.mxu0
  %1102 = vdwg.mxu0
  %v1103 = vmul.f32 %v1100, %v182
  %v1104 = vxor.u32 %v1103, 2147483648
  %v1105 = vmul.f32 %v1104, 1.442695
  %v1106 = vpow.pop %v1105
  %v1107 = vadd.f32 %v1106, 1.0
  %v1108 = vrcp.pop %v1107
  %v1109 = vmul.f32 1.0, %v1108
  %v1110 = vmul.f32 %v1109, %v182
  %v1111 = vsub.f32 %v1110, %v183
  %v1112 = vmul.f32 %v1111, %v915
  %1114 = vrot.lane.b32.xlu0 %v1111, 64
  %v1115 = vpop.permute.xlu0 %1114
  %v1117 = vmul.f32 %v1111, %v1115
  %1119 = vrot.lane.b32.xlu0 %v1117, 32
  %v1120 = vpop.permute.xlu0 %1119
  %v1122 = vadd.f32 %v1112, %v1120
  %v1123 = vtanh.pop %v1122
  %1125 = vrot.lane.b32.xlu0 %v1123, 64
  %v1126 = vpop.permute.xlu0 %1125
  %v1128 = vmul.f32 %v1111, %v1126
  %1130 = vrot.lane.b32.xlu0 %v1023, 32
  %v1131 = vpop.permute.xlu0 %1130
  %v1132 = vsel %vm188, %v1131, 0
  %1134 = vmatprep.subr.mxu0 0.0
  %1135 = vmatpush1.msra.mxu0 0.0
  %1136 = vmatprep.subr.mxu0 0.0
  %1137 = vmatpush1.msra.mxu0 0.0
  %1138 = vmatprep.subr.mxu0 0.0
  %1139 = vmatpush1.msra.mxu0 0.0
  %1140 = vmatprep.subr.mxu0 0.0
  %1141 = vmatpush1.msra.mxu0 0.0
  %1142 = vmatprep.subr.mxu0 0.0
  %1143 = vmatpush1.msra.mxu0 0.0
  %1144 = vmatprep.subr.mxu0 0.0
  %1145 = vmatpush1.msra.mxu0 0.0
  %1146 = vmatprep.subr.mxu0 0.0
  %1147 = vmatpush1.msra.mxu0 0.0
  %1148 = vmatprep.subr.mxu0 0.0
  %1149 = vmatpush1.msra.mxu0 0.0
  %1150 = vmatprep.subr.mxu0 0.0
  %1151 = vmatpush1.msra.mxu0 0.0
  %1152 = vmatprep.subr.mxu0 0.0
  %1153 = vmatpush1.msra.mxu0 0.0
  %1154 = vmatprep.subr.mxu0 0.0
  %1155 = vmatpush1.msra.mxu0 0.0
  %1156 = vmatprep.subr.mxu0 0.0
  %1157 = vmatpush1.msra.mxu0 0.0
  %1158 = vmatprep.subr.mxu0 0.0
  %1159 = vmatpush1.msra.mxu0 %v187
  %1160 = vmatprep.subr.mxu0 0.0
  %1161 = vmatpush1.msra.mxu0 %v186
  %1162 = vmatprep.subr.mxu0 0.0
  %1163 = vmatpush1.msra.mxu0 %v185
  %1164 = vmatprep.subr.mxu0 0.0
  %1165 = vmatpush1.msra.mxu0 %v184
  %1166 = vmatprep.subr.mxu0 0.0
  %1167 = vmatpush2.msra.mxu0 0.0
  %1168 = vmatprep.subr.mxu0 0.0
  %1169 = vmatpush2.msra.mxu0 0.0
  %1170 = vmatprep.subr.mxu0 0.0
  %1171 = vmatpush2.msra.mxu0 0.0
  %1172 = vmatprep.subr.mxu0 0.0
  %1173 = vmatpush2.msra.mxu0 0.0
  %1174 = vmatprep.subr.mxu0 0.0
  %1175 = vmatpush2.msra.mxu0 0.0
  %1176 = vmatprep.subr.mxu0 0.0
  %1177 = vmatpush2.msra.mxu0 0.0
  %1178 = vmatprep.subr.mxu0 0.0
  %1179 = vmatpush2.msra.mxu0 0.0
  %1180 = vmatprep.subr.mxu0 0.0
  %1181 = vmatpush2.msra.mxu0 0.0
  %1182 = vmatprep.subr.mxu0 0.0
  %1183 = vmatpush2.msra.mxu0 0.0
  %1184 = vmatprep.subr.mxu0 0.0
  %1185 = vmatpush2.msra.mxu0 0.0
  %1186 = vmatprep.subr.mxu0 0.0
  %1187 = vmatpush2.msra.mxu0 0.0
  %1188 = vmatprep.subr.mxu0 0.0
  %1189 = vmatpush2.msra.mxu0 0.0
  %1190 = vmatprep.subr.mxu0 0.0
  %1191 = vmatpush2.msra.mxu0 0.0
  %1192 = vmatprep.subr.mxu0 0.0
  %1193 = vmatpush2.msra.mxu0 0.0
  %1194 = vmatprep.subr.mxu0 0.0
  %1195 = vmatpush2.msra.mxu0 0.0
  %1196 = vmatprep.subr.mxu0 0.0
  %1197 = vmatpush2.msra.mxu0 0.0
  %1198 = vmatprep.mubr.f32.mxu0 0.0
  %1199 = vmatmul.mubr.f32.gmra.mxu0 %v1132
  %v1200 = vpop.f32.mrf.mxu0
  %v1201 = vadd.f32 0.0, %v1200
  %v1202 = vpop.f32.mrf.mxu0
  %1203 = vdwg.mxu0
  %v1204 = vadd.f32 %v164, %v1201
  %v1205 = vmul.f32 %v1204, %v182
  %v1206 = vxor.u32 %v1205, 2147483648
  %v1207 = vmul.f32 %v1206, 1.442695
  %v1208 = vpow.pop %v1207
  %v1209 = vadd.f32 %v1208, 1.0
  %v1210 = vrcp.pop %v1209
  %v1211 = vmul.f32 1.0, %v1210
  %v1212 = vmul.f32 %v1211, %v182
  %v1213 = vsub.f32 %v1212, %v183
  %v1214 = vmul.f32 %v1213, %v1017
  %1216 = vrot.lane.b32.xlu0 %v1213, 64
  %v1217 = vpop.permute.xlu0 %1216
  %v1219 = vmul.f32 %v1213, %v1217
  %1221 = vrot.lane.b32.xlu0 %v1219, 32
  %v1222 = vpop.permute.xlu0 %1221
  %v1224 = vadd.f32 %v1214, %v1222
  %v1225 = vtanh.pop %v1224
  %1227 = vrot.lane.b32.xlu0 %v1225, 64
  %v1228 = vpop.permute.xlu0 %1227
  %v1230 = vmul.f32 %v1213, %v1228
  %1233 = vrot.lane.b32.xlu0 %v1128, 64
  %v1234 = vpop.permute.xlu0 %1233
  %v1236 = vsel %vm188, %v1131, %v1234
  %v1238 = vsel %vm408, %v1236, 0
  %1240 = vmatprep.subr.mxu0 0.0
  %1241 = vmatpush1.msra.mxu0 0.0
  %1242 = vmatprep.subr.mxu0 0.0
  %1243 = vmatpush1.msra.mxu0 0.0
  %1244 = vmatprep.subr.mxu0 0.0
  %1245 = vmatpush1.msra.mxu0 0.0
  %1246 = vmatprep.subr.mxu0 0.0
  %1247 = vmatpush1.msra.mxu0 0.0
  %1248 = vmatprep.subr.mxu0 0.0
  %1249 = vmatpush1.msra.mxu0 0.0
  %1250 = vmatprep.subr.mxu0 0.0
  %1251 = vmatpush1.msra.mxu0 0.0
  %1252 = vmatprep.subr.mxu0 0.0
  %1253 = vmatpush1.msra.mxu0 0.0
  %1254 = vmatprep.subr.mxu0 0.0
  %1255 = vmatpush1.msra.mxu0 0.0
  %1256 = vmatprep.subr.mxu0 0.0
  %1257 = vmatpush1.msra.mxu0 %v400
  %1258 = vmatprep.subr.mxu0 0.0
  %1259 = vmatpush1.msra.mxu0 %v399
  %1260 = vmatprep.subr.mxu0 0.0
  %1261 = vmatpush1.msra.mxu0 %v398
  %1262 = vmatprep.subr.mxu0 0.0
  %1263 = vmatpush1.msra.mxu0 %v397
  %1264 = vmatprep.subr.mxu0 0.0
  %1265 = vmatpush1.msra.mxu0 %v396
  %1266 = vmatprep.subr.mxu0 0.0
  %1267 = vmatpush1.msra.mxu0 %v395
  %1268 = vmatprep.subr.mxu0 0.0
  %1269 = vmatpush1.msra.mxu0 %v394
  %1270 = vmatprep.subr.mxu0 0.0
  %1271 = vmatpush1.msra.mxu0 %v393
  %1272 = vmatprep.subr.mxu0 0.0
  %1273 = vmatpush2.msra.mxu0 0.0
  %1274 = vmatprep.subr.mxu0 0.0
  %1275 = vmatpush2.msra.mxu0 0.0
  %1276 = vmatprep.subr.mxu0 0.0
  %1277 = vmatpush2.msra.mxu0 0.0
  %1278 = vmatprep.subr.mxu0 0.0
  %1279 = vmatpush2.msra.mxu0 0.0
  %1280 = vmatprep.subr.mxu0 0.0
  %1281 = vmatpush2.msra.mxu0 0.0
  %1282 = vmatprep.subr.mxu0 0.0
  %1283 = vmatpush2.msra.mxu0 0.0
  %1284 = vmatprep.subr.mxu0 0.0
  %1285 = vmatpush2.msra.mxu0 0.0
  %1286 = vmatprep.subr.mxu0 0.0
  %1287 = vmatpush2.msra.mxu0 0.0
  %1288 = vmatprep.subr.mxu0 0.0
  %1289 = vmatpush2.msra.mxu0 0.0
  %1290 = vmatprep.subr.mxu0 0.0
  %1291 = vmatpush2.msra.mxu0 0.0
  %1292 = vmatprep.subr.mxu0 0.0
  %1293 = vmatpush2.msra.mxu0 0.0
  %1294 = vmatprep.subr.mxu0 0.0
  %1295 = vmatpush2.msra.mxu0 0.0
  %1296 = vmatprep.subr.mxu0 0.0
  %1297 = vmatpush2.msra.mxu0 0.0
  %1298 = vmatprep.subr.mxu0 0.0
  %1299 = vmatpush2.msra.mxu0 0.0
  %1300 = vmatprep.subr.mxu0 0.0
  %1301 = vmatpush2.msra.mxu0 0.0
  %1302 = vmatprep.subr.mxu0 0.0
  %1303 = vmatpush2.msra.mxu0 0.0
  %1304 = vmatprep.mubr.f32.mxu0 0.0
  %1305 = vmatmul.mubr.f32.gmra.mxu0 %v1238
  %v1306 = vpop.f32.mrf.mxu0
  %v1307 = vadd.f32 %v406, %v1306
  %v1308 = vpop.f32.mrf.mxu0
  %1309 = vdwg.mxu0
  %v1310 = vmul.f32 %v1307, %v182
  %v1311 = vxor.u32 %v1310, 2147483648
  %v1312 = vmul.f32 %v1311, 1.442695
  %v1313 = vpow.pop %v1312
  %v1314 = vadd.f32 %v1313, 1.0
  %v1315 = vrcp.pop %v1314
  %v1316 = vmul.f32 1.0, %v1315
  %v1317 = vmul.f32 %v1316, %v182
  %v1318 = vsub.f32 %v1317, %v183
  %v1319 = vmul.f32 %v1318, %v1122
  %1321 = vrot.lane.b32.xlu0 %v1318, 64
  %v1322 = vpop.permute.xlu0 %1321
  %v1324 = vmul.f32 %v1318, %v1322
  %1326 = vrot.lane.b32.xlu0 %v1324, 32
  %v1327 = vpop.permute.xlu0 %1326
  %v1329 = vadd.f32 %v1319, %v1327
  %v1330 = vtanh.pop %v1329
  %1332 = vrot.lane.b32.xlu0 %v1330, 64
  %v1333 = vpop.permute.xlu0 %1332
  %v1335 = vmul.f32 %v1318, %v1333
  %1337 = vrot.lane.b32.xlu0 %v1230, 32
  %v1338 = vpop.permute.xlu0 %1337
  %v1339 = vsel %vm188, %v1338, 0
  %1341 = vmatprep.subr.mxu0 0.0
  %1342 = vmatpush1.msra.mxu0 0.0
  %1343 = vmatprep.subr.mxu0 0.0
  %1344 = vmatpush1.msra.mxu0 0.0
  %1345 = vmatprep.subr.mxu0 0.0
  %1346 = vmatpush1.msra.mxu0 0.0
  %1347 = vmatprep.subr.mxu0 0.0
  %1348 = vmatpush1.msra.mxu0 0.0
  %1349 = vmatprep.subr.mxu0 0.0
  %1350 = vmatpush1.msra.mxu0 0.0
  %1351 = vmatprep.subr.mxu0 0.0
  %1352 = vmatpush1.msra.mxu0 0.0
  %1353 = vmatprep.subr.mxu0 0.0
  %1354 = vmatpush1.msra.mxu0 0.0
  %1355 = vmatprep.subr.mxu0 0.0
  %1356 = vmatpush1.msra.mxu0 0.0
  %1357 = vmatprep.subr.mxu0 0.0
  %1358 = vmatpush1.msra.mxu0 0.0
  %1359 = vmatprep.subr.mxu0 0.0
  %1360 = vmatpush1.msra.mxu0 0.0
  %1361 = vmatprep.subr.mxu0 0.0
  %1362 = vmatpush1.msra.mxu0 0.0
  %1363 = vmatprep.subr.mxu0 0.0
  %1364 = vmatpush1.msra.mxu0 0.0
  %1365 = vmatprep.subr.mxu0 0.0
  %1366 = vmatpush1.msra.mxu0 %v187
  %1367 = vmatprep.subr.mxu0 0.0
  %1368 = vmatpush1.msra.mxu0 %v186
  %1369 = vmatprep.subr.mxu0 0.0
  %1370 = vmatpush1.msra.mxu0 %v185
  %1371 = vmatprep.subr.mxu0 0.0
  %1372 = vmatpush1.msra.mxu0 %v184
  %1373 = vmatprep.subr.mxu0 0.0
  %1374 = vmatpush2.msra.mxu0 0.0
  %1375 = vmatprep.subr.mxu0 0.0
  %1376 = vmatpush2.msra.mxu0 0.0
  %1377 = vmatprep.subr.mxu0 0.0
  %1378 = vmatpush2.msra.mxu0 0.0
  %1379 = vmatprep.subr.mxu0 0.0
  %1380 = vmatpush2.msra.mxu0 0.0
  %1381 = vmatprep.subr.mxu0 0.0
  %1382 = vmatpush2.msra.mxu0 0.0
  %1383 = vmatprep.subr.mxu0 0.0
  %1384 = vmatpush2.msra.mxu0 0.0
  %1385 = vmatprep.subr.mxu0 0.0
  %1386 = vmatpush2.msra.mxu0 0.0
  %1387 = vmatprep.subr.mxu0 0.0
  %1388 = vmatpush2.msra.mxu0 0.0
  %1389 = vmatprep.subr.mxu0 0.0
  %1390 = vmatpush2.msra.mxu0 0.0
  %1391 = vmatprep.subr.mxu0 0.0
  %1392 = vmatpush2.msra.mxu0 0.0
  %1393 = vmatprep.subr.mxu0 0.0
  %1394 = vmatpush2.msra.mxu0 0.0
  %1395 = vmatprep.subr.mxu0 0.0
  %1396 = vmatpush2.msra.mxu0 0.0
  %1397 = vmatprep.subr.mxu0 0.0
  %1398 = vmatpush2.msra.mxu0 0.0
  %1399 = vmatprep.subr.mxu0 0.0
  %1400 = vmatpush2.msra.mxu0 0.0
  %1401 = vmatprep.subr.mxu0 0.0
  %1402 = vmatpush2.msra.mxu0 0.0
  %1403 = vmatprep.subr.mxu0 0.0
  %1404 = vmatpush2.msra.mxu0 0.0
  %1405 = vmatprep.mubr.f32.mxu0 0.0
  %1406 = vmatmul.mubr.f32.gmra.mxu0 %v1339
  %v1407 = vpop.f32.mrf.mxu0
  %v1408 = vadd.f32 0.0, %v1407
  %v1409 = vpop.f32.mrf.mxu0
  %1410 = vdwg.mxu0
  %v1411 = vadd.f32 %v169, %v1408
  %v1412 = vmul.f32 %v1411, %v182
  %v1413 = vxor.u32 %v1412, 2147483648
  %v1414 = vmul.f32 %v1413, 1.442695
  %v1415 = vpow.pop %v1414
  %v1416 = vadd.f32 %v1415, 1.0
  %v1417 = vrcp.pop %v1416
  %v1418 = vmul.f32 1.0, %v1417
  %v1419 = vmul.f32 %v1418, %v182
  %v1420 = vsub.f32 %v1419, %v183
  %v1421 = vmul.f32 %v1420, %v1224
  %1423 = vrot.lane.b32.xlu0 %v1420, 64
  %v1424 = vpop.permute.xlu0 %1423
  %v1426 = vmul.f32 %v1420, %v1424
  %1428 = vrot.lane.b32.xlu0 %v1426, 32
  %v1429 = vpop.permute.xlu0 %1428
  %v1431 = vadd.f32 %v1421, %v1429
  %v1432 = vtanh.pop %v1431
  %1434 = vrot.lane.b32.xlu0 %v1432, 64
  %v1435 = vpop.permute.xlu0 %1434
  %v1437 = vmul.f32 %v1420, %v1435
  %1440 = vrot.lane.b32.xlu0 %v1335, 64
  %v1441 = vpop.permute.xlu0 %1440
  %v1443 = vsel %vm188, %v1338, %v1441
  %v1445 = vsel %vm408, %v1443, 0
  %1447 = vmatprep.subr.mxu0 0.0
  %1448 = vmatpush1.msra.mxu0 0.0
  %1449 = vmatprep.subr.mxu0 0.0
  %1450 = vmatpush1.msra.mxu0 0.0
  %1451 = vmatprep.subr.mxu0 0.0
  %1452 = vmatpush1.msra.mxu0 0.0
  %1453 = vmatprep.subr.mxu0 0.0
  %1454 = vmatpush1.msra.mxu0 0.0
  %1455 = vmatprep.subr.mxu0 0.0
  %1456 = vmatpush1.msra.mxu0 0.0
  %1457 = vmatprep.subr.mxu0 0.0
  %1458 = vmatpush1.msra.mxu0 0.0
  %1459 = vmatprep.subr.mxu0 0.0
  %1460 = vmatpush1.msra.mxu0 0.0
  %1461 = vmatprep.subr.mxu0 0.0
  %1462 = vmatpush1.msra.mxu0 0.0
  %1463 = vmatprep.subr.mxu0 0.0
  %1464 = vmatpush1.msra.mxu0 %v400
  %1465 = vmatprep.subr.mxu0 0.0
  %1466 = vmatpush1.msra.mxu0 %v399
  %1467 = vmatprep.subr.mxu0 0.0
  %1468 = vmatpush1.msra.mxu0 %v398
  %1469 = vmatprep.subr.mxu0 0.0
  %1470 = vmatpush1.msra.mxu0 %v397
  %1471 = vmatprep.subr.mxu0 0.0
  %1472 = vmatpush1.msra.mxu0 %v396
  %1473 = vmatprep.subr.mxu0 0.0
  %1474 = vmatpush1.msra.mxu0 %v395
  %1475 = vmatprep.subr.mxu0 0.0
  %1476 = vmatpush1.msra.mxu0 %v394
  %1477 = vmatprep.subr.mxu0 0.0
  %1478 = vmatpush1.msra.mxu0 %v393
  %1479 = vmatprep.subr.mxu0 0.0
  %1480 = vmatpush2.msra.mxu0 0.0
  %1481 = vmatprep.subr.mxu0 0.0
  %1482 = vmatpush2.msra.mxu0 0.0
  %1483 = vmatprep.subr.mxu0 0.0
  %1484 = vmatpush2.msra.mxu0 0.0
  %1485 = vmatprep.subr.mxu0 0.0
  %1486 = vmatpush2.msra.mxu0 0.0
  %1487 = vmatprep.subr.mxu0 0.0
  %1488 = vmatpush2.msra.mxu0 0.0
  %1489 = vmatprep.subr.mxu0 0.0
  %1490 = vmatpush2.msra.mxu0 0.0
  %1491 = vmatprep.subr.mxu0 0.0
  %1492 = vmatpush2.msra.mxu0 0.0
  %1493 = vmatprep.subr.mxu0 0.0
  %1494 = vmatpush2.msra.mxu0 0.0
  %1495 = vmatprep.subr.mxu0 0.0
  %1496 = vmatpush2.msra.mxu0 0.0
  %1497 = vmatprep.subr.mxu0 0.0
  %1498 = vmatpush2.msra.mxu0 0.0
  %1499 = vmatprep.subr.mxu0 0.0
  %1500 = vmatpush2.msra.mxu0 0.0
  %1501 = vmatprep.subr.mxu0 0.0
  %1502 = vmatpush2.msra.mxu0 0.0
  %1503 = vmatprep.subr.mxu0 0.0
  %1504 = vmatpush2.msra.mxu0 0.0
  %1505 = vmatprep.subr.mxu0 0.0
  %1506 = vmatpush2.msra.mxu0 0.0
  %1507 = vmatprep.subr.mxu0 0.0
  %1508 = vmatpush2.msra.mxu0 0.0
  %1509 = vmatprep.subr.mxu0 0.0
  %1510 = vmatpush2.msra.mxu0 0.0
  %1511 = vmatprep.mubr.f32.mxu0 0.0
  %1512 = vmatmul.mubr.f32.gmra.mxu0 %v1445
  %v1513 = vpop.f32.mrf.mxu0
  %v1514 = vadd.f32 %v406, %v1513
  %v1515 = vpop.f32.mrf.mxu0
  %1516 = vdwg.mxu0
  %v1517 = vmul.f32 %v1514, %v182
  %v1518 = vxor.u32 %v1517, 2147483648
  %v1519 = vmul.f32 %v1518, 1.442695
  %v1520 = vpow.pop %v1519
  %v1521 = vadd.f32 %v1520, 1.0
  %v1522 = vrcp.pop %v1521
  %v1523 = vmul.f32 1.0, %v1522
  %v1524 = vmul.f32 %v1523, %v182
  %v1525 = vsub.f32 %v1524, %v183
  %v1526 = vmul.f32 %v1525, %v1329
  %1528 = vrot.lane.b32.xlu0 %v1525, 64
  %v1529 = vpop.permute.xlu0 %1528
  %v1531 = vmul.f32 %v1525, %v1529
  %1533 = vrot.lane.b32.xlu0 %v1531, 32
  %v1534 = vpop.permute.xlu0 %1533
  %v1536 = vadd.f32 %v1526, %v1534
  %v1537 = vtanh.pop %v1536
  %1539 = vrot.lane.b32.xlu0 %v1537, 64
  %v1540 = vpop.permute.xlu0 %1539
  %v1542 = vmul.f32 %v1525, %v1540
  %1544 = vrot.lane.b32.xlu0 %v1437, 32
  %v1545 = vpop.permute.xlu0 %1544
  %v1546 = vsel %vm188, %v1545, 0
  %1548 = vmatprep.subr.mxu0 0.0
  %1549 = vmatpush1.msra.mxu0 0.0
  %1550 = vmatprep.subr.mxu0 0.0
  %1551 = vmatpush1.msra.mxu0 0.0
  %1552 = vmatprep.subr.mxu0 0.0
  %1553 = vmatpush1.msra.mxu0 0.0
  %1554 = vmatprep.subr.mxu0 0.0
  %1555 = vmatpush1.msra.mxu0 0.0
  %1556 = vmatprep.subr.mxu0 0.0
  %1557 = vmatpush1.msra.mxu0 0.0
  %1558 = vmatprep.subr.mxu0 0.0
  %1559 = vmatpush1.msra.mxu0 0.0
  %1560 = vmatprep.subr.mxu0 0.0
  %1561 = vmatpush1.msra.mxu0 0.0
  %1562 = vmatprep.subr.mxu0 0.0
  %1563 = vmatpush1.msra.mxu0 0.0
  %1564 = vmatprep.subr.mxu0 0.0
  %1565 = vmatpush1.msra.mxu0 0.0
  %1566 = vmatprep.subr.mxu0 0.0
  %1567 = vmatpush1.msra.mxu0 0.0
  %1568 = vmatprep.subr.mxu0 0.0
  %1569 = vmatpush1.msra.mxu0 0.0
  %1570 = vmatprep.subr.mxu0 0.0
  %1571 = vmatpush1.msra.mxu0 0.0
  %1572 = vmatprep.subr.mxu0 0.0
  %1573 = vmatpush1.msra.mxu0 %v187
  %1574 = vmatprep.subr.mxu0 0.0
  %1575 = vmatpush1.msra.mxu0 %v186
  %1576 = vmatprep.subr.mxu0 0.0
  %1577 = vmatpush1.msra.mxu0 %v185
  %1578 = vmatprep.subr.mxu0 0.0
  %1579 = vmatpush1.msra.mxu0 %v184
  %1580 = vmatprep.subr.mxu0 0.0
  %1581 = vmatpush2.msra.mxu0 0.0
  %1582 = vmatprep.subr.mxu0 0.0
  %1583 = vmatpush2.msra.mxu0 0.0
  %1584 = vmatprep.subr.mxu0 0.0
  %1585 = vmatpush2.msra.mxu0 0.0
  %1586 = vmatprep.subr.mxu0 0.0
  %1587 = vmatpush2.msra.mxu0 0.0
  %1588 = vmatprep.subr.mxu0 0.0
  %1589 = vmatpush2.msra.mxu0 0.0
  %1590 = vmatprep.subr.mxu0 0.0
  %1591 = vmatpush2.msra.mxu0 0.0
  %1592 = vmatprep.subr.mxu0 0.0
  %1593 = vmatpush2.msra.mxu0 0.0
  %1594 = vmatprep.subr.mxu0 0.0
  %1595 = vmatpush2.msra.mxu0 0.0
  %1596 = vmatprep.subr.mxu0 0.0
  %1597 = vmatpush2.msra.mxu0 0.0
  %1598 = vmatprep.subr.mxu0 0.0
  %1599 = vmatpush2.msra.mxu0 0.0
  %1600 = vmatprep.subr.mxu0 0.0
  %1601 = vmatpush2.msra.mxu0 0.0
  %1602 = vmatprep.subr.mxu0 0.0
  %1603 = vmatpush2.msra.mxu0 0.0
  %1604 = vmatprep.subr.mxu0 0.0
  %1605 = vmatpush2.msra.mxu0 0.0
  %1606 = vmatprep.subr.mxu0 0.0
  %1607 = vmatpush2.msra.mxu0 0.0
  %1608 = vmatprep.subr.mxu0 0.0
  %1609 = vmatpush2.msra.mxu0 0.0
  %1610 = vmatprep.subr.mxu0 0.0
  %1611 = vmatpush2.msra.mxu0 0.0
  %1612 = vmatprep.mubr.f32.mxu0 0.0
  %1613 = vmatmul.mubr.f32.gmra.mxu0 %v1546
  %v1614 = vpop.f32.mrf.mxu0
  %v1615 = vadd.f32 0.0, %v1614
  %v1616 = vpop.f32.mrf.mxu0
  %1617 = vdwg.mxu0
  %v1618 = vadd.f32 %v174, %v1615
  %v1619 = vmul.f32 %v1618, %v182
  %v1620 = vxor.u32 %v1619, 2147483648
  %v1621 = vmul.f32 %v1620, 1.442695
  %v1622 = vpow.pop %v1621
  %v1623 = vadd.f32 %v1622, 1.0
  %v1624 = vrcp.pop %v1623
  %v1625 = vmul.f32 1.0, %v1624
  %v1626 = vmul.f32 %v1625, %v182
  %v1627 = vsub.f32 %v1626, %v183
  %v1628 = vmul.f32 %v1627, %v1431
  %1630 = vrot.lane.b32.xlu0 %v1627, 64
  %v1631 = vpop.permute.xlu0 %1630
  %v1633 = vmul.f32 %v1627, %v1631
  %1635 = vrot.lane.b32.xlu0 %v1633, 32
  %v1636 = vpop.permute.xlu0 %1635
  %v1638 = vadd.f32 %v1628, %v1636
  %v1639 = vtanh.pop %v1638
  %1641 = vrot.lane.b32.xlu0 %v1639, 64
  %v1642 = vpop.permute.xlu0 %1641
  %v1644 = vmul.f32 %v1627, %v1642
  %1647 = vrot.lane.b32.xlu0 %v1542, 64
  %v1648 = vpop.permute.xlu0 %1647
  %v1650 = vsel %vm188, %v1545, %v1648
  %v1652 = vsel %vm408, %v1650, 0
  %1654 = vmatprep.subr.mxu0 0.0
  %1655 = vmatpush1.msra.mxu0 0.0
  %1656 = vmatprep.subr.mxu0 0.0
  %1657 = vmatpush1.msra.mxu0 0.0
  %1658 = vmatprep.subr.mxu0 0.0
  %1659 = vmatpush1.msra.mxu0 0.0
  %1660 = vmatprep.subr.mxu0 0.0
  %1661 = vmatpush1.msra.mxu0 0.0
  %1662 = vmatprep.subr.mxu0 0.0
  %1663 = vmatpush1.msra.mxu0 0.0
  %1664 = vmatprep.subr.mxu0 0.0
  %1665 = vmatpush1.msra.mxu0 0.0
  %1666 = vmatprep.subr.mxu0 0.0
  %1667 = vmatpush1.msra.mxu0 0.0
  %1668 = vmatprep.subr.mxu0 0.0
  %1669 = vmatpush1.msra.mxu0 0.0
  %1670 = vmatprep.subr.mxu0 0.0
  %1671 = vmatpush1.msra.mxu0 %v400
  %1672 = vmatprep.subr.mxu0 0.0
  %1673 = vmatpush1.msra.mxu0 %v399
  %1674 = vmatprep.subr.mxu0 0.0
  %1675 = vmatpush1.msra.mxu0 %v398
  %1676 = vmatprep.subr.mxu0 0.0
  %1677 = vmatpush1.msra.mxu0 %v397
  %1678 = vmatprep.subr.mxu0 0.0
  %1679 = vmatpush1.msra.mxu0 %v396
  %1680 = vmatprep.subr.mxu0 0.0
  %1681 = vmatpush1.msra.mxu0 %v395
  %1682 = vmatprep.subr.mxu0 0.0
  %1683 = vmatpush1.msra.mxu0 %v394
  %1684 = vmatprep.subr.mxu0 0.0
  %1685 = vmatpush1.msra.mxu0 %v393
  %1686 = vmatprep.subr.mxu0 0.0
  %1687 = vmatpush2.msra.mxu0 0.0
  %1688 = vmatprep.subr.mxu0 0.0
  %1689 = vmatpush2.msra.mxu0 0.0
  %1690 = vmatprep.subr.mxu0 0.0
  %1691 = vmatpush2.msra.mxu0 0.0
  %1692 = vmatprep.subr.mxu0 0.0
  %1693 = vmatpush2.msra.mxu0 0.0
  %1694 = vmatprep.subr.mxu0 0.0
  %1695 = vmatpush2.msra.mxu0 0.0
  %1696 = vmatprep.subr.mxu0 0.0
  %1697 = vmatpush2.msra.mxu0 0.0
  %1698 = vmatprep.subr.mxu0 0.0
  %1699 = vmatpush2.msra.mxu0 0.0
  %1700 = vmatprep.subr.mxu0 0.0
  %1701 = vmatpush2.msra.mxu0 0.0
  %1702 = vmatprep.subr.mxu0 0.0
  %1703 = vmatpush2.msra.mxu0 0.0
  %1704 = vmatprep.subr.mxu0 0.0
  %1705 = vmatpush2.msra.mxu0 0.0
  %1706 = vmatprep.subr.mxu0 0.0
  %1707 = vmatpush2.msra.mxu0 0.0
  %1708 = vmatprep.subr.mxu0 0.0
  %1709 = vmatpush2.msra.mxu0 0.0
  %1710 = vmatprep.subr.mxu0 0.0
  %1711 = vmatpush2.msra.mxu0 0.0
  %1712 = vmatprep.subr.mxu0 0.0
  %1713 = vmatpush2.msra.mxu0 0.0
  %1714 = vmatprep.subr.mxu0 0.0
  %1715 = vmatpush2.msra.mxu0 0.0
  %1716 = vmatprep.subr.mxu0 0.0
  %1717 = vmatpush2.msra.mxu0 0.0
  %1718 = vmatprep.mubr.f32.mxu0 0.0
  %1719 = vmatmul.mubr.f32.gmra.mxu0 %v1652
  %v1720 = vpop.f32.mrf.mxu0
  %v1721 = vadd.f32 %v406, %v1720
  %v1722 = vpop.f32.mrf.mxu0
  %1723 = vdwg.mxu0
  %v1724 = vmul.f32 %v1721, %v182
  %v1725 = vxor.u32 %v1724, 2147483648
  %v1726 = vmul.f32 %v1725, 1.442695
  %v1727 = vpow.pop %v1726
  %v1728 = vadd.f32 %v1727, 1.0
  %v1729 = vrcp.pop %v1728
  %v1730 = vmul.f32 1.0, %v1729
  %v1731 = vmul.f32 %v1730, %v182
  %v1732 = vsub.f32 %v1731, %v183
  %v1733 = vmul.f32 %v1732, %v1536
  %1735 = vrot.lane.b32.xlu0 %v1732, 64
  %v1736 = vpop.permute.xlu0 %1735
  %v1738 = vmul.f32 %v1732, %v1736
  %1740 = vrot.lane.b32.xlu0 %v1738, 32
  %v1741 = vpop.permute.xlu0 %1740
  %v1743 = vadd.f32 %v1733, %v1741
  %v1744 = vtanh.pop %v1743
  %1746 = vrot.lane.b32.xlu0 %v1744, 64
  %v1747 = vpop.permute.xlu0 %1746
  %v1749 = vmul.f32 %v1732, %v1747
  %1751 = vrot.lane.b32.xlu0 %v1644, 32
  %v1752 = vpop.permute.xlu0 %1751
  %1755 = vrot.lane.b32.xlu0 %v1749, 64
  %v1756 = vpop.permute.xlu0 %1755
  %v1758 = vsel %vm188, %v1752, %v1756
  %v1760 = vsel %vm408, %v1758, 0
  %1762 = vmatprep.subr.mxu0 0.0
  %1763 = vmatpush1.msra.mxu0 0.0
  %1764 = vmatprep.subr.mxu0 0.0
  %1765 = vmatpush1.msra.mxu0 0.0
  %1766 = vmatprep.subr.mxu0 0.0
  %1767 = vmatpush1.msra.mxu0 0.0
  %1768 = vmatprep.subr.mxu0 0.0
  %1769 = vmatpush1.msra.mxu0 0.0
  %1770 = vmatprep.subr.mxu0 0.0
  %1771 = vmatpush1.msra.mxu0 0.0
  %1772 = vmatprep.subr.mxu0 0.0
  %1773 = vmatpush1.msra.mxu0 0.0
  %1774 = vmatprep.subr.mxu0 0.0
  %1775 = vmatpush1.msra.mxu0 0.0
  %1776 = vmatprep.subr.mxu0 0.0
  %1777 = vmatpush1.msra.mxu0 0.0
  %1778 = vmatprep.subr.mxu0 0.0
  %1779 = vmatpush1.msra.mxu0 %v400
  %1780 = vmatprep.subr.mxu0 0.0
  %1781 = vmatpush1.msra.mxu0 %v399
  %1782 = vmatprep.subr.mxu0 0.0
  %1783 = vmatpush1.msra.mxu0 %v398
  %1784 = vmatprep.subr.mxu0 0.0
  %1785 = vmatpush1.msra.mxu0 %v397
  %1786 = vmatprep.subr.mxu0 0.0
  %1787 = vmatpush1.msra.mxu0 %v396
  %1788 = vmatprep.subr.mxu0 0.0
  %1789 = vmatpush1.msra.mxu0 %v395
  %1790 = vmatprep.subr.mxu0 0.0
  %1791 = vmatpush1.msra.mxu0 %v394
  %1792 = vmatprep.subr.mxu0 0.0
  %1793 = vmatpush1.msra.mxu0 %v393
  %1794 = vmatprep.subr.mxu0 0.0
  %1795 = vmatpush2.msra.mxu0 0.0
  %1796 = vmatprep.subr.mxu0 0.0
  %1797 = vmatpush2.msra.mxu0 0.0
  %1798 = vmatprep.subr.mxu0 0.0
  %1799 = vmatpush2.msra.mxu0 0.0
  %1800 = vmatprep.subr.mxu0 0.0
  %1801 = vmatpush2.msra.mxu0 0.0
  %1802 = vmatprep.subr.mxu0 0.0
  %1803 = vmatpush2.msra.mxu0 0.0
  %1804 = vmatprep.subr.mxu0 0.0
  %1805 = vmatpush2.msra.mxu0 0.0
  %1806 = vmatprep.subr.mxu0 0.0
  %1807 = vmatpush2.msra.mxu0 0.0
  %1808 = vmatprep.subr.mxu0 0.0
  %1809 = vmatpush2.msra.mxu0 0.0
  %1810 = vmatprep.subr.mxu0 0.0
  %1811 = vmatpush2.msra.mxu0 0.0
  %1812 = vmatprep.subr.mxu0 0.0
  %1813 = vmatpush2.msra.mxu0 0.0
  %1814 = vmatprep.subr.mxu0 0.0
  %1815 = vmatpush2.msra.mxu0 0.0
  %1816 = vmatprep.subr.mxu0 0.0
  %1817 = vmatpush2.msra.mxu0 0.0
  %1818 = vmatprep.subr.mxu0 0.0
  %1819 = vmatpush2.msra.mxu0 0.0
  %1820 = vmatprep.subr.mxu0 0.0
  %1821 = vmatpush2.msra.mxu0 0.0
  %1822 = vmatprep.subr.mxu0 0.0
  %1823 = vmatpush2.msra.mxu0 0.0
  %1824 = vmatprep.subr.mxu0 0.0
  %1825 = vmatpush2.msra.mxu0 0.0
  %1826 = vmatprep.mubr.f32.mxu0 0.0
  %1827 = vmatmul.mubr.f32.gmra.mxu0 %v1760
  %v1828 = vpop.f32.mrf.mxu0
  %v1829 = vadd.f32 %v406, %v1828
  %v1830 = vpop.f32.mrf.mxu0
  %1831 = vdwg.mxu0
  %v1832 = vmul.f32 %v1829, %v182
  %v1833 = vxor.u32 %v1832, 2147483648
  %v1834 = vmul.f32 %v1833, 1.442695
  %v1835 = vpow.pop %v1834
  %v1836 = vadd.f32 %v1835, 1.0
  %v1837 = vrcp.pop %v1836
  %v1838 = vmul.f32 1.0, %v1837
  %v1839 = vmul.f32 %v1838, %v182
  %v1840 = vsub.f32 %v1839, %v183
  %v1841 = vmul.f32 %v1840, %v1743
  %1843 = vrot.lane.b32.xlu0 %v1840, 64
  %v1844 = vpop.permute.xlu0 %1843
  %v1846 = vmul.f32 %v1840, %v1844
  %1848 = vrot.lane.b32.xlu0 %v1846, 32
  %v1849 = vpop.permute.xlu0 %1848
  %v1851 = vadd.f32 %v1841, %v1849
  %v1852 = vtanh.pop %v1851
  %1854 = vrot.lane.b32.xlu0 %v1852, 64
  %v1855 = vpop.permute.xlu0 %1854
  %v1857 = vmul.f32 %v1840, %v1855
  %v1858 = vld [vmem:[%s6] sm:$0xff]
  %v1859 = vld [vmem:[%s6 + $0x8] sm:$0xff]
  %v1860 = vld [vmem:[%s6 + $0x10] sm:$0xff]
  %v1861 = vld [vmem:[%s6 + $0x18] sm:$0xff]
  %v1862 = vld [vmem:[#allocation2] sm:$0x1]
  %v1864 = vlaneseq
  %v1865 = vshrl.u32 %v1864, 7
  %v1866 = vsub.s32 0, %v1865
  %v1867 = vrot.slane %v1862, %v1866
  %1870 = vrot.lane.b32.xlu0 %v1857, 32
  %v1871 = vpop.permute.xlu0 %1870
  %v1872 = vsel %vm188, %v1871, 0
  %1874 = vmatprep.subr.mxu0 0.0
  %1875 = vmatpush1.msra.mxu0 0.0
  %1876 = vmatprep.subr.mxu0 0.0
  %1877 = vmatpush1.msra.mxu0 0.0
  %1878 = vmatprep.subr.mxu0 0.0
  %1879 = vmatpush1.msra.mxu0 0.0
  %1880 = vmatprep.subr.mxu0 0.0
  %1881 = vmatpush1.msra.mxu0 0.0
  %1882 = vmatprep.subr.mxu0 0.0
  %1883 = vmatpush1.msra.mxu0 0.0
  %1884 = vmatprep.subr.mxu0 0.0
  %1885 = vmatpush1.msra.mxu0 0.0
  %1886 = vmatprep.subr.mxu0 0.0
  %1887 = vmatpush1.msra.mxu0 0.0
  %1888 = vmatprep.subr.mxu0 0.0
  %1889 = vmatpush1.msra.mxu0 0.0
  %1890 = vmatprep.subr.mxu0 0.0
  %1891 = vmatpush1.msra.mxu0 0.0
  %1892 = vmatprep.subr.mxu0 0.0
  %1893 = vmatpush1.msra.mxu0 0.0
  %1894 = vmatprep.subr.mxu0 0.0
  %1895 = vmatpush1.msra.mxu0 0.0
  %1896 = vmatprep.subr.mxu0 0.0
  %1897 = vmatpush1.msra.mxu0 0.0
  %1898 = vmatprep.subr.mxu0 0.0
  %1899 = vmatpush1.msra.mxu0 %v1861
  %1900 = vmatprep.subr.mxu0 0.0
  %1901 = vmatpush1.msra.mxu0 %v1860
  %1902 = vmatprep.subr.mxu0 0.0
  %1903 = vmatpush1.msra.mxu0 %v1859
  %1904 = vmatprep.subr.mxu0 0.0
  %1905 = vmatpush1.msra.mxu0 %v1858
  %1906 = vmatprep.subr.mxu0 0.0
  %1907 = vmatpush2.msra.mxu0 0.0
  %1908 = vmatprep.subr.mxu0 0.0
  %1909 = vmatpush2.msra.mxu0 0.0
  %1910 = vmatprep.subr.mxu0 0.0
  %1911 = vmatpush2.msra.mxu0 0.0
  %1912 = vmatprep.subr.mxu0 0.0
  %1913 = vmatpush2.msra.mxu0 0.0
  %1914 = vmatprep.subr.mxu0 0.0
  %1915 = vmatpush2.msra.mxu0 0.0
  %1916 = vmatprep.subr.mxu0 0.0
  %1917 = vmatpush2.msra.mxu0 0.0
  %1918 = vmatprep.subr.mxu0 0.0
  %1919 = vmatpush2.msra.mxu0 0.0
  %1920 = vmatprep.subr.mxu0 0.0
  %1921 = vmatpush2.msra.mxu0 0.0
  %1922 = vmatprep.subr.mxu0 0.0
  %1923 = vmatpush2.msra.mxu0 0.0
  %1924 = vmatprep.subr.mxu0 0.0
  %1925 = vmatpush2.msra.mxu0 0.0
  %1926 = vmatprep.subr.mxu0 0.0
  %1927 = vmatpush2.msra.mxu0 0.0
  %1928 = vmatprep.subr.mxu0 0.0
  %1929 = vmatpush2.msra.mxu0 0.0
  %1930 = vmatprep.subr.mxu0 0.0
  %1931 = vmatpush2.msra.mxu0 0.0
  %1932 = vmatprep.subr.mxu0 0.0
  %1933 = vmatpush2.msra.mxu0 0.0
  %1934 = vmatprep.subr.mxu0 0.0
  %1935 = vmatpush2.msra.mxu0 0.0
  %1936 = vmatprep.subr.mxu0 0.0
  %1937 = vmatpush2.msra.mxu0 0.0
  %1938 = vmatprep.mubr.f32.mxu0 0.0
  %1939 = vmatmul.mubr.f32.gmra.mxu0 %v1872
  %v1940 = vpop.f32.mrf.mxu0
  %v1941 = vadd.f32 %v1867, %v1940
  %v1942 = vpop.f32.mrf.mxu0
  %1943 = vdwg.mxu0
  %vm1944 = vcmask 7168
  %1945 = vst.msk [vmem:[%s8] sm:$0xff] %vm1944, %v1941
  // Predicated region
  $region34: #{rnn_forward.1} parent=0 // pred_check
    _
  $region35: #{rnn_forward.1} parent=0 // pred_check_branch
    %1947 = sbr.rel (0) target = $region37
  $region36: #{rnn_forward.1} parent=0 // pred_region
    _
  $region37: #{rnn_forward.1} parent=0 // pred_fallthru
    _
  // Predicated region
  $region38: #{rnn_forward.1} parent=0 // pred_check
    _
  $region39: #{rnn_forward.1} parent=0 // pred_check_branch
    %1949 = sbr.rel (0) target = $region41
  $region40: #{rnn_forward.1} parent=0 // pred_region
    _
  $region41: #{rnn_forward.1} parent=0 // pred_fallthru
    _

</llo_original>
